<compile_context>
chip_gen: v6e
topology: v6e:2x2x1
jax: 0.10.0
libtpu: 0.0.40
codegen_flags: <defaults>
</compile_context>

<pallas_src>
import functools

import jax
import jax.numpy as jnp
from jax.experimental import pallas as pl
from jax.experimental.pallas import tpu as pltpu


def _shift_lanes(v, s):
    """out[:, p] = v[:, p + s] for 0 <= p + s < n, else 0 (zero-filled ends)."""
    n = v.shape[-1]
    if s == 0:
        return v
    pad = jnp.zeros((v.shape[0], abs(s)), v.dtype)
    if s > 0:
        return jnp.concatenate([v[:, s:], pad], axis=1)
    return jnp.concatenate([pad, v[:, :n + s]], axis=1)


# -----------------------------------------------------------------------------
# Pallas kernel: one ConvLSTM layer.  Grid = (B, T); h/c are VMEM-resident
# output blocks (constant block index over T).  All arrays are (C, H*W) with
# H*W on the lane axis.
# -----------------------------------------------------------------------------
def _convlstm_layer_kernel(x_ref, w_ref, b_ref, y_ref, h_ref, c_ref,
                           *, H, W, K, C):
    # x_ref : (C, HW)         input at step t (squeezed (b, t) dims)
    # w_ref : (4C, K*K*2C)    conv weights; contraction dim ordered (dy, dx, cin),
    #                         cin = [x channels 0..C-1, h channels C..2C-1]
    # b_ref : (4C, 1)         conv bias (lane-broadcast)
    # y_ref : (C, HW)         per-step hidden output (next layer's input)
    # h_ref : (C, HW)         hidden state, resident across T
    # c_ref : (C, HW)         cell state, resident across T
    HW = H * W
    p = (K - 1) // 2  # 'same' padding -- matches the PyTorch conv for odd K only
    t = pl.program_id(1)

    @pl.when(t == 0)
    def _init():
        h_ref[...] = jnp.zeros_like(h_ref)
        c_ref[...] = jnp.zeros_like(c_ref)

    x = x_ref[...].astype(jnp.float32)        # (C, HW)
    h = h_ref[...].astype(jnp.float32)        # (C, HW)
    xh = jnp.concatenate([x, h], axis=0)      # (2C, HW)

    # Column index of each lane (same for every sublane) for x-boundary masks.
    # Row (y) boundaries are already handled by the zero-fill in _shift_lanes.
    xx = jax.lax.broadcasted_iota(jnp.int32, (2 * C, HW), 1) % W

    pieces = []
    for dy in range(K):
        for dx in range(K):
            sy, sx = dy - p, dx - p
            piece = _shift_lanes(xh, sy * W + sx)
            if sx < 0:
                piece = jnp.where(xx >= -sx, piece, 0.0)
            elif sx > 0:
                piece = jnp.where(xx < W - sx, piece, 0.0)
            pieces.append(piece)
    patch = jnp.concatenate(pieces, axis=0)   # (K*K*2C, HW)

    # Single MXU contraction of depth K*K*2C, output lanes = HW.
    gates = jnp.dot(w_ref[...].astype(jnp.float32), patch,
                    preferred_element_type=jnp.float32)        # (4C, HW)
    gates = gates + b_ref[...].astype(jnp.float32)

    i = jax.nn.sigmoid(gates[0 * C:1 * C])
    f = jax.nn.sigmoid(gates[1 * C:2 * C])
    g = jnp.tanh(gates[2 * C:3 * C])
    o = jax.nn.sigmoid(gates[3 * C:4 * C])

    c_new = f * c_ref[...].astype(jnp.float32) + i * g
    h_new = o * jnp.tanh(c_new)

    h_ref[...] = h_new.astype(h_ref.dtype)
    c_ref[...] = c_new.astype(c_ref.dtype)
    y_ref[...] = h_new.astype(y_ref.dtype)


def convlstm_layer(x_seq, w, b, *, H, W, K):
    """One ConvLSTM layer over the full sequence.

    x_seq: (B, T, C, H*W).  Returns (y_seq, h_last, c_last) with
    y_seq: (B, T, C, H*W), h_last/c_last: (B, C, H*W).
    """
    B, T, C, HW = x_seq.shape
    kern = functools.partial(_convlstm_layer_kernel, H=H, W=W, K=K, C=C)

    y_seq, h_last, c_last = pl.pallas_call(
        kern,
        grid=(B, T),
        in_specs=[
            pl.BlockSpec((None, None, C, HW), lambda bi, ti: (bi, ti, 0, 0)),
            pl.BlockSpec((4 * C, K * K * 2 * C), lambda bi, ti: (0, 0)),
            pl.BlockSpec((4 * C, 1), lambda bi, ti: (0, 0)),
        ],
        out_specs=[
            pl.BlockSpec((None, None, C, HW), lambda bi, ti: (bi, ti, 0, 0)),
            pl.BlockSpec((None, C, HW), lambda bi, ti: (bi, 0, 0)),
            pl.BlockSpec((None, C, HW), lambda bi, ti: (bi, 0, 0)),
        ],
        out_shape=[
            jax.ShapeDtypeStruct((B, T, C, HW), x_seq.dtype),
            jax.ShapeDtypeStruct((B, C, HW), x_seq.dtype),
            jax.ShapeDtypeStruct((B, C, HW), x_seq.dtype),
        ],
        compiler_params=pltpu.CompilerParams(
            dimension_semantics=("parallel", "arbitrary")),
    )(x_seq, w, b)
    return y_seq, h_last, c_last


# -----------------------------------------------------------------------------
# StackedConvLSTM forward (eval mode), mirroring the PyTorch control flow.
# -----------------------------------------------------------------------------
def stacked_convlstm_forward(params, inputs, *, n_layers, K):
    """inputs: (B, T, C, H, W) like the PyTorch module (NCHW per step).

    Returns (hiddens, attns): hiddens is a list of [h, c] per layer in NCHW,
    attns is None (is_attn=False).
    """
    B, T, C, H, W = inputs.shape
    x_seq = inputs.reshape(B, T, C, H * W)     # free reshape, stays NCHW
    hiddens = []
    for i in range(n_layers):
        w, b = params[i]
        x_seq, h_last, c_last = convlstm_layer(x_seq, w, b, H=H, W=W, K=K)
        hiddens.append([h_last.reshape(B, C, H, W),
                        c_last.reshape(B, C, H, W)])
    return hiddens, None


def init_params(key, n_layers, C, K, dtype=jnp.float32):
    # Kernel weight layout: w[g, (dy*K + dx)*2C + cin]; a PyTorch conv weight of
    # shape (4C, 2C, K, K) maps via w.permute(0, 2, 3, 1).reshape(4C, K*K*2C),
    # with cin = [x channels, h channels] (conv over concat[x, h]).
    params = []
    for _ in range(n_layers):
        key, sub = jax.random.split(key)
        w = jax.random.normal(sub, (4 * C, K * K * 2 * C), dtype) * 0.1
        b = jnp.zeros((4 * C, 1), dtype)
        b = b.at[C:2 * C, 0].set(1.0)   # forget-gate bias
        params.append((w, b))
    return params


if __name__ == "__main__":
    B, T, C, H, W = 2, 8, 4, 16, 16
    n_layers, K = 2, 3

    key = jax.random.PRNGKey(0)
    key, kx = jax.random.split(key)
    x = jax.random.normal(kx, (B, T, C, H, W), jnp.float32)
    params = init_params(key, n_layers, C, K)

    fwd = jax.jit(functools.partial(stacked_convlstm_forward,
                                    n_layers=n_layers, K=K))
    hiddens, attns = fwd(params, x)
    jax.block_until_ready(hiddens)

    assert attns is None
    assert len(hiddens) == n_layers
    for h, c in hiddens:
        assert h.shape == (B, C, H, W) and c.shape == (B, C, H, W)
        assert bool(jnp.all(jnp.isfinite(h))) and bool(jnp.all(jnp.isfinite(c)))

    print("KERNEL_OK")
</pallas_src>

<mosaic_0001>
module attributes {stable_mosaic.version = 11 : i64} {
  func.func @_convlstm_layer_kernel(%arg0: i32, %arg1: i32, %arg2: memref<1x1x4x256xf32, #tpu.memory_space<vmem>>, %arg3: memref<16x72xf32, #tpu.memory_space<vmem>>, %arg4: memref<16x1xf32, #tpu.memory_space<vmem>>, %arg5: memref<1x1x4x256xf32, #tpu.memory_space<vmem>>, %arg6: memref<1x4x256xf32, #tpu.memory_space<vmem>>, %arg7: memref<1x4x256xf32, #tpu.memory_space<vmem>>) attributes {dimension_semantics = [#tpu.dimension_semantics<parallel>, #tpu.dimension_semantics<arbitrary>], iteration_bounds = array<i64: 2, 8>, scalar_prefetch = 0 : i64, scratch_operands = 0 : i64, tpu.core_type = #tpu.core_type<tc>, window_params = [{transform_indices = @transform_0, window_bounds = array<i64: 1, 1, 4, 256>}, {pipeline_mode = #tpu.pipeline_mode<synchronous>, transform_indices = @transform_1, window_bounds = array<i64: 16, 72>}, {pipeline_mode = #tpu.pipeline_mode<synchronous>, transform_indices = @transform_2, window_bounds = array<i64: 16, 1>}, {transform_indices = @transform_3, window_bounds = array<i64: 1, 1, 4, 256>}, {transform_indices = @transform_4, window_bounds = array<i64: 1, 4, 256>}, {transform_indices = @transform_5, window_bounds = array<i64: 1, 4, 256>}]} {
    %c0_i32 = arith.constant 0 : i32
    %0 = arith.cmpi eq, %arg1, %c0_i32 : i32
    %1 = arith.extui %0 : i1 to i32
    %c0_i32_0 = arith.constant 0 : i32
    %2 = arith.cmpi ne, %1, %c0_i32_0 : i32
    scf.if %2 {
      %cst_50 = arith.constant 0.000000e+00 : f32
      %115 = vector.broadcast %cst_50 : f32 to vector<4x256xf32>
      %c0_51 = arith.constant 0 : index
      %c0_52 = arith.constant 0 : index
      %c0_53 = arith.constant 0 : index
      %116 = vector.load %arg6[%c0_51, %c0_52, %c0_53] : memref<1x4x256xf32, #tpu.memory_space<vmem>>, vector<1x4x256xf32>
      %117 = vector.shape_cast %116 : vector<1x4x256xf32> to vector<4x256xf32>
      %118 = vector.shape_cast %115 : vector<4x256xf32> to vector<1x4x256xf32>
      tpu.vector_store %arg6[%c0_51, %c0_52, %c0_53], %118 {strides = array<i32>} : memref<1x4x256xf32, #tpu.memory_space<vmem>>, vector<1x4x256xf32>,
      %cst_54 = arith.constant 0.000000e+00 : f32
      %119 = vector.broadcast %cst_54 : f32 to vector<4x256xf32>
      %c0_55 = arith.constant 0 : index
      %c0_56 = arith.constant 0 : index
      %c0_57 = arith.constant 0 : index
      %120 = vector.load %arg7[%c0_55, %c0_56, %c0_57] : memref<1x4x256xf32, #tpu.memory_space<vmem>>, vector<1x4x256xf32>
      %121 = vector.shape_cast %120 : vector<1x4x256xf32> to vector<4x256xf32>
      %122 = vector.shape_cast %119 : vector<4x256xf32> to vector<1x4x256xf32>
      tpu.vector_store %arg7[%c0_55, %c0_56, %c0_57], %122 {strides = array<i32>} : memref<1x4x256xf32, #tpu.memory_space<vmem>>, vector<1x4x256xf32>,
    } else {
    }
    %c0 = arith.constant 0 : index
    %c0_1 = arith.constant 0 : index
    %c0_2 = arith.constant 0 : index
    %c0_3 = arith.constant 0 : index
    %3 = vector.load %arg2[%c0, %c0_1, %c0_2, %c0_3] : memref<1x1x4x256xf32, #tpu.memory_space<vmem>>, vector<1x1x4x256xf32>
    %4 = vector.shape_cast %3 : vector<1x1x4x256xf32> to vector<4x256xf32>
    %c0_4 = arith.constant 0 : index
    %c0_5 = arith.constant 0 : index
    %c0_6 = arith.constant 0 : index
    %5 = vector.load %arg6[%c0_4, %c0_5, %c0_6] : memref<1x4x256xf32, #tpu.memory_space<vmem>>, vector<1x4x256xf32>
    %6 = vector.shape_cast %5 : vector<1x4x256xf32> to vector<4x256xf32>
    %7 = tpu.concatenate %4, %6 in 0 : vector<4x256xf32>, vector<4x256xf32> -> vector<8x256xf32>
    %8 = tpu.iota {dimensions = array<i32: 1>} : vector<8x256xi32>
    %c16_i32 = arith.constant 16 : i32
    %c0_i32_7 = arith.constant 0 : i32
    %9 = arith.cmpi eq, %c16_i32, %c0_i32_7 : i32
    %c1_i32 = arith.constant 1 : i32
    %10 = arith.select %9, %c1_i32, %c16_i32 : i32
    %11 = vector.broadcast %10 : i32 to vector<8x256xi32>
    %12 = arith.remsi %8, %11 : vector<8x256xi32>
    %c0_i32_8 = arith.constant 0 : i32
    %13 = vector.broadcast %c0_i32_8 : i32 to vector<8x256xi32>
    %14 = arith.cmpi ne, %12, %13 : vector<8x256xi32>
    %c0_i32_9 = arith.constant 0 : i32
    %15 = vector.broadcast %c0_i32_9 : i32 to vector<8x256xi32>
    %16 = arith.cmpi slt, %12, %15 : vector<8x256xi32>
    %c0_i32_10 = arith.constant 0 : i32
    %17 = arith.cmpi slt, %10, %c0_i32_10 : i32
    %18 = vector.broadcast %17 : i1 to vector<8x256xi1>
    %19 = vector.broadcast %18 : vector<8x256xi1> to vector<8x256xi1>
    %20 = arith.xori %16, %19 : vector<8x256xi1>
    %21 = arith.andi %20, %14 : vector<8x256xi1>
    %22 = vector.broadcast %10 : i32 to vector<8x256xi32>
    %23 = arith.addi %12, %22 : vector<8x256xi32>
    %24 = arith.select %21, %23, %12 : vector<8x256xi1>, vector<8x256xi32>
    %cst = arith.constant 0.000000e+00 : f32
    %25 = vector.broadcast %cst : f32 to vector<8x17xf32>
    %26 = vector.extract_strided_slice %7 {offsets = [0, 0], sizes = [8, 239], strides = [1, 1]} : vector<8x256xf32> to vector<8x239xf32>
    %27 = tpu.concatenate %25, %26 in 1 : vector<8x17xf32>, vector<8x239xf32> -> vector<8x256xf32>
    %c1_i32_11 = arith.constant 1 : i32
    %28 = vector.broadcast %c1_i32_11 : i32 to vector<8x256xi32>
    %29 = arith.cmpi sge, %24, %28 : vector<8x256xi32>
    %cst_12 = arith.constant 0.000000e+00 : f32
    %30 = vector.broadcast %cst_12 : f32 to vector<8x256xf32>
    %31 = arith.select %29, %27, %30 : vector<8x256xi1>, vector<8x256xf32>
    %cst_13 = arith.constant 0.000000e+00 : f32
    %32 = vector.broadcast %cst_13 : f32 to vector<8x16xf32>
    %33 = vector.extract_strided_slice %7 {offsets = [0, 0], sizes = [8, 240], strides = [1, 1]} : vector<8x256xf32> to vector<8x240xf32>
    %34 = tpu.concatenate %32, %33 in 1 : vector<8x16xf32>, vector<8x240xf32> -> vector<8x256xf32>
    %cst_14 = arith.constant 0.000000e+00 : f32
    %35 = vector.broadcast %cst_14 : f32 to vector<8x15xf32>
    %36 = vector.extract_strided_slice %7 {offsets = [0, 0], sizes = [8, 241], strides = [1, 1]} : vector<8x256xf32> to vector<8x241xf32>
    %37 = tpu.concatenate %35, %36 in 1 : vector<8x15xf32>, vector<8x241xf32> -> vector<8x256xf32>
    %c15_i32 = arith.constant 15 : i32
    %38 = vector.broadcast %c15_i32 : i32 to vector<8x256xi32>
    %39 = arith.cmpi slt, %24, %38 : vector<8x256xi32>
    %cst_15 = arith.constant 0.000000e+00 : f32
    %40 = vector.broadcast %cst_15 : f32 to vector<8x256xf32>
    %41 = arith.select %39, %37, %40 : vector<8x256xi1>, vector<8x256xf32>
    %cst_16 = arith.constant 0.000000e+00 : f32
    %42 = vector.broadcast %cst_16 : f32 to vector<8x1xf32>
    %43 = vector.extract_strided_slice %7 {offsets = [0, 0], sizes = [8, 255], strides = [1, 1]} : vector<8x256xf32> to vector<8x255xf32>
    %44 = tpu.concatenate %42, %43 in 1 : vector<8x1xf32>, vector<8x255xf32> -> vector<8x256xf32>
    %c1_i32_17 = arith.constant 1 : i32
    %45 = vector.broadcast %c1_i32_17 : i32 to vector<8x256xi32>
    %46 = arith.cmpi sge, %24, %45 : vector<8x256xi32>
    %cst_18 = arith.constant 0.000000e+00 : f32
    %47 = vector.broadcast %cst_18 : f32 to vector<8x256xf32>
    %48 = arith.select %46, %44, %47 : vector<8x256xi1>, vector<8x256xf32>
    %cst_19 = arith.constant 0.000000e+00 : f32
    %49 = vector.broadcast %cst_19 : f32 to vector<8x1xf32>
    %50 = vector.extract_strided_slice %7 {offsets = [0, 1], sizes = [8, 255], strides = [1, 1]} : vector<8x256xf32> to vector<8x255xf32>
    %51 = tpu.concatenate %50, %49 in 1 : vector<8x255xf32>, vector<8x1xf32> -> vector<8x256xf32>
    %c15_i32_20 = arith.constant 15 : i32
    %52 = vector.broadcast %c15_i32_20 : i32 to vector<8x256xi32>
    %53 = arith.cmpi slt, %24, %52 : vector<8x256xi32>
    %cst_21 = arith.constant 0.000000e+00 : f32
    %54 = vector.broadcast %cst_21 : f32 to vector<8x256xf32>
    %55 = arith.select %53, %51, %54 : vector<8x256xi1>, vector<8x256xf32>
    %cst_22 = arith.constant 0.000000e+00 : f32
    %56 = vector.broadcast %cst_22 : f32 to vector<8x15xf32>
    %57 = vector.extract_strided_slice %7 {offsets = [0, 15], sizes = [8, 241], strides = [1, 1]} : vector<8x256xf32> to vector<8x241xf32>
    %58 = tpu.concatenate %57, %56 in 1 : vector<8x241xf32>, vector<8x15xf32> -> vector<8x256xf32>
    %c1_i32_23 = arith.constant 1 : i32
    %59 = vector.broadcast %c1_i32_23 : i32 to vector<8x256xi32>
    %60 = arith.cmpi sge, %24, %59 : vector<8x256xi32>
    %cst_24 = arith.constant 0.000000e+00 : f32
    %61 = vector.broadcast %cst_24 : f32 to vector<8x256xf32>
    %62 = arith.select %60, %58, %61 : vector<8x256xi1>, vector<8x256xf32>
    %cst_25 = arith.constant 0.000000e+00 : f32
    %63 = vector.broadcast %cst_25 : f32 to vector<8x16xf32>
    %64 = vector.extract_strided_slice %7 {offsets = [0, 16], sizes = [8, 240], strides = [1, 1]} : vector<8x256xf32> to vector<8x240xf32>
    %65 = tpu.concatenate %64, %63 in 1 : vector<8x240xf32>, vector<8x16xf32> -> vector<8x256xf32>
    %cst_26 = arith.constant 0.000000e+00 : f32
    %66 = vector.broadcast %cst_26 : f32 to vector<8x17xf32>
    %67 = vector.extract_strided_slice %7 {offsets = [0, 17], sizes = [8, 239], strides = [1, 1]} : vector<8x256xf32> to vector<8x239xf32>
    %68 = tpu.concatenate %67, %66 in 1 : vector<8x239xf32>, vector<8x17xf32> -> vector<8x256xf32>
    %c15_i32_27 = arith.constant 15 : i32
    %69 = vector.broadcast %c15_i32_27 : i32 to vector<8x256xi32>
    %70 = arith.cmpi slt, %24, %69 : vector<8x256xi32>
    %cst_28 = arith.constant 0.000000e+00 : f32
    %71 = vector.broadcast %cst_28 : f32 to vector<8x256xf32>
    %72 = arith.select %70, %68, %71 : vector<8x256xi1>, vector<8x256xf32>
    %73 = tpu.concatenate %31, %34, %41, %48, %7, %55, %62, %65, %72 in 0 : vector<8x256xf32>, vector<8x256xf32>, vector<8x256xf32>, vector<8x256xf32>, vector<8x256xf32>, vector<8x256xf32>, vector<8x256xf32>, vector<8x256xf32>, vector<8x256xf32> -> vector<72x256xf32>
    %c0_29 = arith.constant 0 : index
    %c0_30 = arith.constant 0 : index
    %74 = vector.load %arg3[%c0_29, %c0_30] : memref<16x72xf32, #tpu.memory_space<vmem>>, vector<16x72xf32>
    %cst_31 = arith.constant dense<0.000000e+00> : vector<16x256xf32>
    %75 = tpu.matmul %74, %73, %cst_31 {dimension_numbers = #tpu.dot_dimension_numbers<[1], [0], [0], [1], [0, 0, 1, 1], [], []>} : vector<16x72xf32>, vector<72x256xf32>, vector<16x256xf32> -> vector<16x256xf32>
    %c0_32 = arith.constant 0 : index
    %c0_33 = arith.constant 0 : index
    %76 = vector.load %arg4[%c0_32, %c0_33] : memref<16x1xf32, #tpu.memory_space<vmem>>, vector<16x1xf32>
    %77 = vector.broadcast %76 : vector<16x1xf32> to vector<16x256xf32>
    %78 = arith.addf %75, %77 : vector<16x256xf32>
    %79 = vector.extract_strided_slice %78 {offsets = [0, 0], sizes = [4, 256], strides = [1, 1]} : vector<16x256xf32> to vector<4x256xf32>
    %80 = arith.negf %79 : vector<4x256xf32>
    %81 = math.exp %80 : vector<4x256xf32>
    %cst_34 = arith.constant 1.000000e+00 : f32
    %82 = vector.broadcast %cst_34 : f32 to vector<4x256xf32>
    %83 = arith.addf %82, %81 : vector<4x256xf32>
    %84 = arith.divf %82, %83 : vector<4x256xf32>
    %85 = vector.extract_strided_slice %78 {offsets = [4, 0], sizes = [4, 256], strides = [1, 1]} : vector<16x256xf32> to vector<4x256xf32>
    %86 = arith.negf %85 : vector<4x256xf32>
    %87 = math.exp %86 : vector<4x256xf32>
    %cst_35 = arith.constant 1.000000e+00 : f32
    %88 = vector.broadcast %cst_35 : f32 to vector<4x256xf32>
    %89 = arith.addf %88, %87 : vector<4x256xf32>
    %90 = arith.divf %88, %89 : vector<4x256xf32>
    %91 = vector.extract_strided_slice %78 {offsets = [8, 0], sizes = [4, 256], strides = [1, 1]} : vector<16x256xf32> to vector<4x256xf32>
    %92 = math.tanh %91 : vector<4x256xf32>
    %93 = vector.extract_strided_slice %78 {offsets = [12, 0], sizes = [4, 256], strides = [1, 1]} : vector<16x256xf32> to vector<4x256xf32>
    %94 = arith.negf %93 : vector<4x256xf32>
    %95 = math.exp %94 : vector<4x256xf32>
    %cst_36 = arith.constant 1.000000e+00 : f32
    %96 = vector.broadcast %cst_36 : f32 to vector<4x256xf32>
    %97 = arith.addf %96, %95 : vector<4x256xf32>
    %98 = arith.divf %96, %97 : vector<4x256xf32>
    %c0_37 = arith.constant 0 : index
    %c0_38 = arith.constant 0 : index
    %c0_39 = arith.constant 0 : index
    %99 = vector.load %arg7[%c0_37, %c0_38, %c0_39] : memref<1x4x256xf32, #tpu.memory_space<vmem>>, vector<1x4x256xf32>
    %100 = vector.shape_cast %99 : vector<1x4x256xf32> to vector<4x256xf32>
    %101 = arith.mulf %90, %100 : vector<4x256xf32>
    %102 = arith.mulf %84, %92 : vector<4x256xf32>
    %103 = arith.addf %101, %102 : vector<4x256xf32>
    %104 = math.tanh %103 : vector<4x256xf32>
    %105 = arith.mulf %98, %104 : vector<4x256xf32>
    %c0_40 = arith.constant 0 : index
    %c0_41 = arith.constant 0 : index
    %c0_42 = arith.constant 0 : index
    %106 = vector.load %arg6[%c0_40, %c0_41, %c0_42] : memref<1x4x256xf32, #tpu.memory_space<vmem>>, vector<1x4x256xf32>
    %107 = vector.shape_cast %106 : vector<1x4x256xf32> to vector<4x256xf32>
    %108 = vector.shape_cast %105 : vector<4x256xf32> to vector<1x4x256xf32>
    tpu.vector_store %arg6[%c0_40, %c0_41, %c0_42], %108 {strides = array<i32>} : memref<1x4x256xf32, #tpu.memory_space<vmem>>, vector<1x4x256xf32>,
    %c0_43 = arith.constant 0 : index
    %c0_44 = arith.constant 0 : index
    %c0_45 = arith.constant 0 : index
    %109 = vector.load %arg7[%c0_43, %c0_44, %c0_45] : memref<1x4x256xf32, #tpu.memory_space<vmem>>, vector<1x4x256xf32>
    %110 = vector.shape_cast %109 : vector<1x4x256xf32> to vector<4x256xf32>
    %111 = vector.shape_cast %103 : vector<4x256xf32> to vector<1x4x256xf32>
    tpu.vector_store %arg7[%c0_43, %c0_44, %c0_45], %111 {strides = array<i32>} : memref<1x4x256xf32, #tpu.memory_space<vmem>>, vector<1x4x256xf32>,
    %c0_46 = arith.constant 0 : index
    %c0_47 = arith.constant 0 : index
    %c0_48 = arith.constant 0 : index
    %c0_49 = arith.constant 0 : index
    %112 = vector.load %arg5[%c0_46, %c0_47, %c0_48, %c0_49] : memref<1x1x4x256xf32, #tpu.memory_space<vmem>>, vector<1x1x4x256xf32>
    %113 = vector.shape_cast %112 : vector<1x1x4x256xf32> to vector<4x256xf32>
    %114 = vector.shape_cast %105 : vector<4x256xf32> to vector<1x1x4x256xf32>
    tpu.vector_store %arg5[%c0_46, %c0_47, %c0_48, %c0_49], %114 {strides = array<i32>} : memref<1x1x4x256xf32, #tpu.memory_space<vmem>>, vector<1x1x4x256xf32>,
    return
  }
  func.func @transform_0(%arg0: i32, %arg1: i32) -> (i32, i32, i32, i32) {
    %c0_i32 = arith.constant 0 : i32
    %c0_i32_0 = arith.constant 0 : i32
    %c0_i32_1 = arith.constant 0 : i32
    return %arg0, %arg1, %c0_i32, %c0_i32_0 : i32, i32, i32, i32
  }
  func.func @transform_1(%arg0: i32, %arg1: i32) -> (i32, i32) {
    %c0_i32 = arith.constant 0 : i32
    %c0_i32_0 = arith.constant 0 : i32
    %c0_i32_1 = arith.constant 0 : i32
    return %c0_i32, %c0_i32_0 : i32, i32
  }
  func.func @transform_2(%arg0: i32, %arg1: i32) -> (i32, i32) {
    %c0_i32 = arith.constant 0 : i32
    %c0_i32_0 = arith.constant 0 : i32
    %c0_i32_1 = arith.constant 0 : i32
    return %c0_i32, %c0_i32_0 : i32, i32
  }
  func.func @transform_3(%arg0: i32, %arg1: i32) -> (i32, i32, i32, i32) {
    %c0_i32 = arith.constant 0 : i32
    %c0_i32_0 = arith.constant 0 : i32
    %c0_i32_1 = arith.constant 0 : i32
    return %arg0, %arg1, %c0_i32, %c0_i32_0 : i32, i32, i32, i32
  }
  func.func @transform_4(%arg0: i32, %arg1: i32) -> (i32, i32, i32) {
    %c0_i32 = arith.constant 0 : i32
    %c0_i32_0 = arith.constant 0 : i32
    %c0_i32_1 = arith.constant 0 : i32
    return %arg0, %c0_i32, %c0_i32_0 : i32, i32, i32
  }
  func.func @transform_5(%arg0: i32, %arg1: i32) -> (i32, i32, i32) {
    %c0_i32 = arith.constant 0 : i32
    %c0_i32_0 = arith.constant 0 : i32
    %c0_i32_1 = arith.constant 0 : i32
    return %arg0, %c0_i32, %c0_i32_0 : i32, i32, i32
  }
}

module attributes {stable_mosaic.version = 11 : i64} {
  func.func @_convlstm_layer_kernel(%arg0: i32, %arg1: i32, %arg2: memref<1x1x4x256xf32, #tpu.memory_space<vmem>>, %arg3: memref<16x72xf32, #tpu.memory_space<vmem>>, %arg4: memref<16x1xf32, #tpu.memory_space<vmem>>, %arg5: memref<1x1x4x256xf32, #tpu.memory_space<vmem>>, %arg6: memref<1x4x256xf32, #tpu.memory_space<vmem>>, %arg7: memref<1x4x256xf32, #tpu.memory_space<vmem>>) attributes {dimension_semantics = [#tpu.dimension_semantics<parallel>, #tpu.dimension_semantics<arbitrary>], iteration_bounds = array<i64: 2, 8>, scalar_prefetch = 0 : i64, scratch_operands = 0 : i64, tpu.core_type = #tpu.core_type<tc>, window_params = [{transform_indices = @transform_0, window_bounds = array<i64: 1, 1, 4, 256>}, {pipeline_mode = #tpu.pipeline_mode<synchronous>, transform_indices = @transform_1, window_bounds = array<i64: 16, 72>}, {pipeline_mode = #tpu.pipeline_mode<synchronous>, transform_indices = @transform_2, window_bounds = array<i64: 16, 1>}, {transform_indices = @transform_3, window_bounds = array<i64: 1, 1, 4, 256>}, {transform_indices = @transform_4, window_bounds = array<i64: 1, 4, 256>}, {transform_indices = @transform_5, window_bounds = array<i64: 1, 4, 256>}]} {
    %c0_i32 = arith.constant 0 : i32
    %0 = arith.cmpi eq, %arg1, %c0_i32 : i32
    %1 = arith.extui %0 : i1 to i32
    %c0_i32_0 = arith.constant 0 : i32
    %2 = arith.cmpi ne, %1, %c0_i32_0 : i32
    scf.if %2 {
      %cst_50 = arith.constant 0.000000e+00 : f32
      %115 = vector.broadcast %cst_50 : f32 to vector<4x256xf32>
      %c0_51 = arith.constant 0 : index
      %c0_52 = arith.constant 0 : index
      %c0_53 = arith.constant 0 : index
      %116 = vector.load %arg6[%c0_51, %c0_52, %c0_53] : memref<1x4x256xf32, #tpu.memory_space<vmem>>, vector<1x4x256xf32>
      %117 = vector.shape_cast %116 : vector<1x4x256xf32> to vector<4x256xf32>
      %118 = vector.shape_cast %115 : vector<4x256xf32> to vector<1x4x256xf32>
      tpu.vector_store %arg6[%c0_51, %c0_52, %c0_53], %118 {strides = array<i32>} : memref<1x4x256xf32, #tpu.memory_space<vmem>>, vector<1x4x256xf32>,
      %cst_54 = arith.constant 0.000000e+00 : f32
      %119 = vector.broadcast %cst_54 : f32 to vector<4x256xf32>
      %c0_55 = arith.constant 0 : index
      %c0_56 = arith.constant 0 : index
      %c0_57 = arith.constant 0 : index
      %120 = vector.load %arg7[%c0_55, %c0_56, %c0_57] : memref<1x4x256xf32, #tpu.memory_space<vmem>>, vector<1x4x256xf32>
      %121 = vector.shape_cast %120 : vector<1x4x256xf32> to vector<4x256xf32>
      %122 = vector.shape_cast %119 : vector<4x256xf32> to vector<1x4x256xf32>
      tpu.vector_store %arg7[%c0_55, %c0_56, %c0_57], %122 {strides = array<i32>} : memref<1x4x256xf32, #tpu.memory_space<vmem>>, vector<1x4x256xf32>,
    } else {
    }
    %c0 = arith.constant 0 : index
    %c0_1 = arith.constant 0 : index
    %c0_2 = arith.constant 0 : index
    %c0_3 = arith.constant 0 : index
    %3 = vector.load %arg2[%c0, %c0_1, %c0_2, %c0_3] : memref<1x1x4x256xf32, #tpu.memory_space<vmem>>, vector<1x1x4x256xf32>
    %4 = vector.shape_cast %3 : vector<1x1x4x256xf32> to vector<4x256xf32>
    %c0_4 = arith.constant 0 : index
    %c0_5 = arith.constant 0 : index
    %c0_6 = arith.constant 0 : index
    %5 = vector.load %arg6[%c0_4, %c0_5, %c0_6] : memref<1x4x256xf32, #tpu.memory_space<vmem>>, vector<1x4x256xf32>
    %6 = vector.shape_cast %5 : vector<1x4x256xf32> to vector<4x256xf32>
    %7 = tpu.concatenate %4, %6 in 0 : vector<4x256xf32>, vector<4x256xf32> -> vector<8x256xf32>
    %8 = tpu.iota {dimensions = array<i32: 1>} : vector<8x256xi32>
    %c16_i32 = arith.constant 16 : i32
    %c0_i32_7 = arith.constant 0 : i32
    %9 = arith.cmpi eq, %c16_i32, %c0_i32_7 : i32
    %c1_i32 = arith.constant 1 : i32
    %10 = arith.select %9, %c1_i32, %c16_i32 : i32
    %11 = vector.broadcast %10 : i32 to vector<8x256xi32>
    %12 = arith.remsi %8, %11 : vector<8x256xi32>
    %c0_i32_8 = arith.constant 0 : i32
    %13 = vector.broadcast %c0_i32_8 : i32 to vector<8x256xi32>
    %14 = arith.cmpi ne, %12, %13 : vector<8x256xi32>
    %c0_i32_9 = arith.constant 0 : i32
    %15 = vector.broadcast %c0_i32_9 : i32 to vector<8x256xi32>
    %16 = arith.cmpi slt, %12, %15 : vector<8x256xi32>
    %c0_i32_10 = arith.constant 0 : i32
    %17 = arith.cmpi slt, %10, %c0_i32_10 : i32
    %18 = vector.broadcast %17 : i1 to vector<8x256xi1>
    %19 = vector.broadcast %18 : vector<8x256xi1> to vector<8x256xi1>
    %20 = arith.xori %16, %19 : vector<8x256xi1>
    %21 = arith.andi %20, %14 : vector<8x256xi1>
    %22 = vector.broadcast %10 : i32 to vector<8x256xi32>
    %23 = arith.addi %12, %22 : vector<8x256xi32>
    %24 = arith.select %21, %23, %12 : vector<8x256xi1>, vector<8x256xi32>
    %cst = arith.constant 0.000000e+00 : f32
    %25 = vector.broadcast %cst : f32 to vector<8x17xf32>
    %26 = vector.extract_strided_slice %7 {offsets = [0, 0], sizes = [8, 239], strides = [1, 1]} : vector<8x256xf32> to vector<8x239xf32>
    %27 = tpu.concatenate %25, %26 in 1 : vector<8x17xf32>, vector<8x239xf32> -> vector<8x256xf32>
    %c1_i32_11 = arith.constant 1 : i32
    %28 = vector.broadcast %c1_i32_11 : i32 to vector<8x256xi32>
    %29 = arith.cmpi sge, %24, %28 : vector<8x256xi32>
    %cst_12 = arith.constant 0.000000e+00 : f32
    %30 = vector.broadcast %cst_12 : f32 to vector<8x256xf32>
    %31 = arith.select %29, %27, %30 : vector<8x256xi1>, vector<8x256xf32>
    %cst_13 = arith.constant 0.000000e+00 : f32
    %32 = vector.broadcast %cst_13 : f32 to vector<8x16xf32>
    %33 = vector.extract_strided_slice %7 {offsets = [0, 0], sizes = [8, 240], strides = [1, 1]} : vector<8x256xf32> to vector<8x240xf32>
    %34 = tpu.concatenate %32, %33 in 1 : vector<8x16xf32>, vector<8x240xf32> -> vector<8x256xf32>
    %cst_14 = arith.constant 0.000000e+00 : f32
    %35 = vector.broadcast %cst_14 : f32 to vector<8x15xf32>
    %36 = vector.extract_strided_slice %7 {offsets = [0, 0], sizes = [8, 241], strides = [1, 1]} : vector<8x256xf32> to vector<8x241xf32>
    %37 = tpu.concatenate %35, %36 in 1 : vector<8x15xf32>, vector<8x241xf32> -> vector<8x256xf32>
    %c15_i32 = arith.constant 15 : i32
    %38 = vector.broadcast %c15_i32 : i32 to vector<8x256xi32>
    %39 = arith.cmpi slt, %24, %38 : vector<8x256xi32>
    %cst_15 = arith.constant 0.000000e+00 : f32
    %40 = vector.broadcast %cst_15 : f32 to vector<8x256xf32>
    %41 = arith.select %39, %37, %40 : vector<8x256xi1>, vector<8x256xf32>
    %cst_16 = arith.constant 0.000000e+00 : f32
    %42 = vector.broadcast %cst_16 : f32 to vector<8x1xf32>
    %43 = vector.extract_strided_slice %7 {offsets = [0, 0], sizes = [8, 255], strides = [1, 1]} : vector<8x256xf32> to vector<8x255xf32>
    %44 = tpu.concatenate %42, %43 in 1 : vector<8x1xf32>, vector<8x255xf32> -> vector<8x256xf32>
    %c1_i32_17 = arith.constant 1 : i32
    %45 = vector.broadcast %c1_i32_17 : i32 to vector<8x256xi32>
    %46 = arith.cmpi sge, %24, %45 : vector<8x256xi32>
    %cst_18 = arith.constant 0.000000e+00 : f32
    %47 = vector.broadcast %cst_18 : f32 to vector<8x256xf32>
    %48 = arith.select %46, %44, %47 : vector<8x256xi1>, vector<8x256xf32>
    %cst_19 = arith.constant 0.000000e+00 : f32
    %49 = vector.broadcast %cst_19 : f32 to vector<8x1xf32>
    %50 = vector.extract_strided_slice %7 {offsets = [0, 1], sizes = [8, 255], strides = [1, 1]} : vector<8x256xf32> to vector<8x255xf32>
    %51 = tpu.concatenate %50, %49 in 1 : vector<8x255xf32>, vector<8x1xf32> -> vector<8x256xf32>
    %c15_i32_20 = arith.constant 15 : i32
    %52 = vector.broadcast %c15_i32_20 : i32 to vector<8x256xi32>
    %53 = arith.cmpi slt, %24, %52 : vector<8x256xi32>
    %cst_21 = arith.constant 0.000000e+00 : f32
    %54 = vector.broadcast %cst_21 : f32 to vector<8x256xf32>
    %55 = arith.select %53, %51, %54 : vector<8x256xi1>, vector<8x256xf32>
    %cst_22 = arith.constant 0.000000e+00 : f32
    %56 = vector.broadcast %cst_22 : f32 to vector<8x15xf32>
    %57 = vector.extract_strided_slice %7 {offsets = [0, 15], sizes = [8, 241], strides = [1, 1]} : vector<8x256xf32> to vector<8x241xf32>
    %58 = tpu.concatenate %57, %56 in 1 : vector<8x241xf32>, vector<8x15xf32> -> vector<8x256xf32>
    %c1_i32_23 = arith.constant 1 : i32
    %59 = vector.broadcast %c1_i32_23 : i32 to vector<8x256xi32>
    %60 = arith.cmpi sge, %24, %59 : vector<8x256xi32>
    %cst_24 = arith.constant 0.000000e+00 : f32
    %61 = vector.broadcast %cst_24 : f32 to vector<8x256xf32>
    %62 = arith.select %60, %58, %61 : vector<8x256xi1>, vector<8x256xf32>
    %cst_25 = arith.constant 0.000000e+00 : f32
    %63 = vector.broadcast %cst_25 : f32 to vector<8x16xf32>
    %64 = vector.extract_strided_slice %7 {offsets = [0, 16], sizes = [8, 240], strides = [1, 1]} : vector<8x256xf32> to vector<8x240xf32>
    %65 = tpu.concatenate %64, %63 in 1 : vector<8x240xf32>, vector<8x16xf32> -> vector<8x256xf32>
    %cst_26 = arith.constant 0.000000e+00 : f32
    %66 = vector.broadcast %cst_26 : f32 to vector<8x17xf32>
    %67 = vector.extract_strided_slice %7 {offsets = [0, 17], sizes = [8, 239], strides = [1, 1]} : vector<8x256xf32> to vector<8x239xf32>
    %68 = tpu.concatenate %67, %66 in 1 : vector<8x239xf32>, vector<8x17xf32> -> vector<8x256xf32>
    %c15_i32_27 = arith.constant 15 : i32
    %69 = vector.broadcast %c15_i32_27 : i32 to vector<8x256xi32>
    %70 = arith.cmpi slt, %24, %69 : vector<8x256xi32>
    %cst_28 = arith.constant 0.000000e+00 : f32
    %71 = vector.broadcast %cst_28 : f32 to vector<8x256xf32>
    %72 = arith.select %70, %68, %71 : vector<8x256xi1>, vector<8x256xf32>
    %73 = tpu.concatenate %31, %34, %41, %48, %7, %55, %62, %65, %72 in 0 : vector<8x256xf32>, vector<8x256xf32>, vector<8x256xf32>, vector<8x256xf32>, vector<8x256xf32>, vector<8x256xf32>, vector<8x256xf32>, vector<8x256xf32>, vector<8x256xf32> -> vector<72x256xf32>
    %c0_29 = arith.constant 0 : index
    %c0_30 = arith.constant 0 : index
    %74 = vector.load %arg3[%c0_29, %c0_30] : memref<16x72xf32, #tpu.memory_space<vmem>>, vector<16x72xf32>
    %cst_31 = arith.constant dense<0.000000e+00> : vector<16x256xf32>
    %75 = tpu.matmul %74, %73, %cst_31 {dimension_numbers = #tpu.dot_dimension_numbers<[1], [0], [0], [1], [0, 0, 1, 1], [], []>} : vector<16x72xf32>, vector<72x256xf32>, vector<16x256xf32> -> vector<16x256xf32>
    %c0_32 = arith.constant 0 : index
    %c0_33 = arith.constant 0 : index
    %76 = vector.load %arg4[%c0_32, %c0_33] : memref<16x1xf32, #tpu.memory_space<vmem>>, vector<16x1xf32>
    %77 = vector.broadcast %76 : vector<16x1xf32> to vector<16x256xf32>
    %78 = arith.addf %75, %77 : vector<16x256xf32>
    %79 = vector.extract_strided_slice %78 {offsets = [0, 0], sizes = [4, 256], strides = [1, 1]} : vector<16x256xf32> to vector<4x256xf32>
    %80 = arith.negf %79 : vector<4x256xf32>
    %81 = math.exp %80 : vector<4x256xf32>
    %cst_34 = arith.constant 1.000000e+00 : f32
    %82 = vector.broadcast %cst_34 : f32 to vector<4x256xf32>
    %83 = arith.addf %82, %81 : vector<4x256xf32>
    %84 = arith.divf %82, %83 : vector<4x256xf32>
    %85 = vector.extract_strided_slice %78 {offsets = [4, 0], sizes = [4, 256], strides = [1, 1]} : vector<16x256xf32> to vector<4x256xf32>
    %86 = arith.negf %85 : vector<4x256xf32>
    %87 = math.exp %86 : vector<4x256xf32>
    %cst_35 = arith.constant 1.000000e+00 : f32
    %88 = vector.broadcast %cst_35 : f32 to vector<4x256xf32>
    %89 = arith.addf %88, %87 : vector<4x256xf32>
    %90 = arith.divf %88, %89 : vector<4x256xf32>
    %91 = vector.extract_strided_slice %78 {offsets = [8, 0], sizes = [4, 256], strides = [1, 1]} : vector<16x256xf32> to vector<4x256xf32>
    %92 = math.tanh %91 : vector<4x256xf32>
    %93 = vector.extract_strided_slice %78 {offsets = [12, 0], sizes = [4, 256], strides = [1, 1]} : vector<16x256xf32> to vector<4x256xf32>
    %94 = arith.negf %93 : vector<4x256xf32>
    %95 = math.exp %94 : vector<4x256xf32>
    %cst_36 = arith.constant 1.000000e+00 : f32
    %96 = vector.broadcast %cst_36 : f32 to vector<4x256xf32>
    %97 = arith.addf %96, %95 : vector<4x256xf32>
    %98 = arith.divf %96, %97 : vector<4x256xf32>
    %c0_37 = arith.constant 0 : index
    %c0_38 = arith.constant 0 : index
    %c0_39 = arith.constant 0 : index
    %99 = vector.load %arg7[%c0_37, %c0_38, %c0_39] : memref<1x4x256xf32, #tpu.memory_space<vmem>>, vector<1x4x256xf32>
    %100 = vector.shape_cast %99 : vector<1x4x256xf32> to vector<4x256xf32>
    %101 = arith.mulf %90, %100 : vector<4x256xf32>
    %102 = arith.mulf %84, %92 : vector<4x256xf32>
    %103 = arith.addf %101, %102 : vector<4x256xf32>
    %104 = math.tanh %103 : vector<4x256xf32>
    %105 = arith.mulf %98, %104 : vector<4x256xf32>
    %c0_40 = arith.constant 0 : index
    %c0_41 = arith.constant 0 : index
    %c0_42 = arith.constant 0 : index
    %106 = vector.load %arg6[%c0_40, %c0_41, %c0_42] : memref<1x4x256xf32, #tpu.memory_space<vmem>>, vector<1x4x256xf32>
    %107 = vector.shape_cast %106 : vector<1x4x256xf32> to vector<4x256xf32>
    %108 = vector.shape_cast %105 : vector<4x256xf32> to vector<1x4x256xf32>
    tpu.vector_store %arg6[%c0_40, %c0_41, %c0_42], %108 {strides = array<i32>} : memref<1x4x256xf32, #tpu.memory_space<vmem>>, vector<1x4x256xf32>,
    %c0_43 = arith.constant 0 : index
    %c0_44 = arith.constant 0 : index
    %c0_45 = arith.constant 0 : index
    %109 = vector.load %arg7[%c0_43, %c0_44, %c0_45] : memref<1x4x256xf32, #tpu.memory_space<vmem>>, vector<1x4x256xf32>
    %110 = vector.shape_cast %109 : vector<1x4x256xf32> to vector<4x256xf32>
    %111 = vector.shape_cast %103 : vector<4x256xf32> to vector<1x4x256xf32>
    tpu.vector_store %arg7[%c0_43, %c0_44, %c0_45], %111 {strides = array<i32>} : memref<1x4x256xf32, #tpu.memory_space<vmem>>, vector<1x4x256xf32>,
    %c0_46 = arith.constant 0 : index
    %c0_47 = arith.constant 0 : index
    %c0_48 = arith.constant 0 : index
    %c0_49 = arith.constant 0 : index
    %112 = vector.load %arg5[%c0_46, %c0_47, %c0_48, %c0_49] : memref<1x1x4x256xf32, #tpu.memory_space<vmem>>, vector<1x1x4x256xf32>
    %113 = vector.shape_cast %112 : vector<1x1x4x256xf32> to vector<4x256xf32>
    %114 = vector.shape_cast %105 : vector<4x256xf32> to vector<1x1x4x256xf32>
    tpu.vector_store %arg5[%c0_46, %c0_47, %c0_48, %c0_49], %114 {strides = array<i32>} : memref<1x1x4x256xf32, #tpu.memory_space<vmem>>, vector<1x1x4x256xf32>,
    return
  }
  func.func @transform_0(%arg0: i32, %arg1: i32) -> (i32, i32, i32, i32) {
    %c0_i32 = arith.constant 0 : i32
    %c0_i32_0 = arith.constant 0 : i32
    %c0_i32_1 = arith.constant 0 : i32
    return %arg0, %arg1, %c0_i32, %c0_i32_0 : i32, i32, i32, i32
  }
  func.func @transform_1(%arg0: i32, %arg1: i32) -> (i32, i32) {
    %c0_i32 = arith.constant 0 : i32
    %c0_i32_0 = arith.constant 0 : i32
    %c0_i32_1 = arith.constant 0 : i32
    return %c0_i32, %c0_i32_0 : i32, i32
  }
  func.func @transform_2(%arg0: i32, %arg1: i32) -> (i32, i32) {
    %c0_i32 = arith.constant 0 : i32
    %c0_i32_0 = arith.constant 0 : i32
    %c0_i32_1 = arith.constant 0 : i32
    return %c0_i32, %c0_i32_0 : i32, i32
  }
  func.func @transform_3(%arg0: i32, %arg1: i32) -> (i32, i32, i32, i32) {
    %c0_i32 = arith.constant 0 : i32
    %c0_i32_0 = arith.constant 0 : i32
    %c0_i32_1 = arith.constant 0 : i32
    return %arg0, %arg1, %c0_i32, %c0_i32_0 : i32, i32, i32, i32
  }
  func.func @transform_4(%arg0: i32, %arg1: i32) -> (i32, i32, i32) {
    %c0_i32 = arith.constant 0 : i32
    %c0_i32_0 = arith.constant 0 : i32
    %c0_i32_1 = arith.constant 0 : i32
    return %arg0, %c0_i32, %c0_i32_0 : i32, i32, i32
  }
  func.func @transform_5(%arg0: i32, %arg1: i32) -> (i32, i32, i32) {
    %c0_i32 = arith.constant 0 : i32
    %c0_i32_0 = arith.constant 0 : i32
    %c0_i32_1 = arith.constant 0 : i32
    return %arg0, %c0_i32, %c0_i32_0 : i32, i32, i32
  }
}

</mosaic_0001>

<llo_original>
// kernel: stacked_convlstm_forward.3
$region0: #{stacked_convlstm_forward.3}
  #allocation0 [shape = 'u32[]', space=smem, size = 0x4, offset = 0x4, fixed_abs, tag = 'smem constant byte address 0x4 - core index']
  #allocation1 [shape = 'u32[144,128]{1,0:T(1,128)}', space=vmem, size = 0x12000, scoped, tag = 'internal scratch']
  %s0 = inlined_call_operand.vmem [shape: f32[2,8,4,256], index: 0, kind: input, shape index: {}]
  %s1 = inlined_call_operand.vmem [shape: f32[16,72], index: 1, kind: input, shape index: {}]
  %s2 = inlined_call_operand.vmem [shape: f32[16,1], index: 2, kind: input, shape index: {}]
  %s3 = inlined_call_operand.hbm [shape: f32[2,8,4,256], index: 3, kind: output, shape index: {0}]
  %s4 = inlined_call_operand.vmem [shape: f32[2,4,256], index: 4, kind: output, shape index: {1}]
  %s5 = inlined_call_operand.vmem [shape: f32[2,4,256], index: 5, kind: output, shape index: {2}]
  %6 = xla_tuple %s3, %s4, %s5
  %s7 = sld [smem:[#allocation0]]
  $region65: #{stacked_convlstm_forward.3} parent=0
    _
  %s9 = ssub.s32 1, %s7
  %s10 = scalar_select 0, %s9, %s7
  $region1: #{stacked_convlstm_forward.3} parent=0
    #allocation2 [shape = 'u8[8192]{0}', space=vmem, size = 0x2000, scoped, tag = 'output window, operand 0']
    #allocation3 [shape = 's32[2]{0}', space=sflag, size = 0x8, scoped, tag = 'scoped memory for stacked_convlstm_forward.3']
    %11 = vsyncpa [#allocation3], 0
    %s12 = scalar_lea.sflag [#allocation3], 1
    %13 = vsyncpa %s12, 0
    loop: start=0, step=1, limit=18
    $region2: #{stacked_convlstm_forward.3} parent=1 // loop_pre_header
      _
    $region3: #{stacked_convlstm_forward.3} parent=1 // loop_header
      %s15 = sphi 0, %s19
      %p16 = scmp.ge.s32.totalorder %s15, 18
      %s22 = sphi 0, %s34
      %s23 = sphi 0, %s30
      %s24 = sphi 0, %s22
      %s25 = sphi 0, %s23
      %s26 = sphi 0, %s24
      %s27 = sphi 0, %s25
      %s39 = sphi 0, %s41
      %s42 = sphi 0, %s39
      %s43 = sphi 0, %s42
      %s59 = sphi 0, %s43
      %s63 = sphi 0, %s63
      %s65 = sphi 0, %s63
      %s66 = sphi 0, %s65
      %s80 = sphi 0, %s66
      %s84 = sphi 0, %s84
      %s86 = sphi 0, %s84
      %s87 = sphi 0, %s86
      %s101 = sphi 0, %s87
      %s109 = sphi 0, %s111
      %s112 = sphi 0, %s109
      %s113 = sphi 0, %s112
      %s129 = sphi 0, %s113
      %s135 = sphi 0, %s137
      %s138 = sphi 0, %s135
      %s139 = sphi 0, %s138
      %s155 = sphi 0, %s139
      %s161 = sphi 0, %s163
      %s164 = sphi 0, %s161
      %s165 = sphi 0, %s164
      %s181 = sphi 0, %s165
    $region4: #{stacked_convlstm_forward.3} parent=1 // loop_header_branch
      %18 = sbr.rel (%p16) target = $region8
    $region5: #{stacked_convlstm_forward.3} parent=1 // loop_body
      %s20 = ssub.s32 %s15, 1
      %s21 = ssub.s32 %s15, 2
      %s28 = sadd.s32 1, %s23
      %p29 = scmp.ge.s32.totalorder %s28, 8
      %s30 = scalar_select %p29, 0, %s28
      %s31 = sadd.s32 1, %s22
      %s32 = scalar_select %p29, %s31, %s22
      %p33 = scmp.ge.s32.totalorder %s32, 2
      %s34 = scalar_select %p33, 0, %s32
      %s35 = ssub.s32 %s22, %s34
      %s36 = ssub.s32 %s23, %s30
      %s37 = sor.u32 %s35, %s36
      %p38 = scmp.eq.s32.totalorder %s37, 0
      %s40 = sadd.s32 %s39, 1
      %s41 = scalar_select %p38, %s39, %s40
      %p44 = pneg %p38
      %p45 = scmp.eq.s32.totalorder %s15, 15
      %p46 = por %p44, %p45
      %p47 = scmp.ne.s32.totalorder %s39, %s42
      %p48 = scmp.eq.s32.totalorder %s15, 0
      %p49 = por %p47, %p48
      %p50 = scmp.ne.s32.totalorder %s39, %s42
      %p51 = scmp.eq.s32.totalorder %s20, 15
      %p52 = por %p50, %p51
      %p53 = scmp.ne.s32.totalorder %s42, %s43
      %p54 = scmp.eq.s32.totalorder %s20, 0
      %p55 = por %p53, %p54
      %p56 = scmp.ne.s32.totalorder %s42, %s43
      %p57 = scmp.eq.s32.totalorder %s21, 15
      %p58 = por %p56, %p57
      %p60 = scmp.ne.s32.totalorder %s43, %s59
      %p61 = scmp.eq.s32.totalorder %s21, 0
      %p62 = por %p60, %p61
      %s64 = sadd.s32 %s63, 1
      %p67 = scmp.eq.s32.totalorder %s15, 15
      %p68 = scmp.ne.s32.totalorder %s63, %s65
      %p69 = scmp.eq.s32.totalorder %s15, 0
      %p70 = por %p68, %p69
      %p71 = scmp.ne.s32.totalorder %s63, %s65
      %p72 = scmp.eq.s32.totalorder %s20, 15
      %p73 = por %p71, %p72
      %p74 = scmp.ne.s32.totalorder %s65, %s66
      %p75 = scmp.eq.s32.totalorder %s20, 0
      %p76 = por %p74, %p75
      %p77 = scmp.ne.s32.totalorder %s65, %s66
      %p78 = scmp.eq.s32.totalorder %s21, 15
      %p79 = por %p77, %p78
      %p81 = scmp.ne.s32.totalorder %s66, %s80
      %p82 = scmp.eq.s32.totalorder %s21, 0
      %p83 = por %p81, %p82
      %s85 = sadd.s32 %s84, 1
      %p88 = scmp.eq.s32.totalorder %s15, 15
      %p89 = scmp.ne.s32.totalorder %s84, %s86
      %p90 = scmp.eq.s32.totalorder %s15, 0
      %p91 = por %p89, %p90
      %p92 = scmp.ne.s32.totalorder %s84, %s86
      %p93 = scmp.eq.s32.totalorder %s20, 15
      %p94 = por %p92, %p93
      %p95 = scmp.ne.s32.totalorder %s86, %s87
      %p96 = scmp.eq.s32.totalorder %s20, 0
      %p97 = por %p95, %p96
      %p98 = scmp.ne.s32.totalorder %s86, %s87
      %p99 = scmp.eq.s32.totalorder %s21, 15
      %p100 = por %p98, %p99
      %p102 = scmp.ne.s32.totalorder %s87, %s101
      %p103 = scmp.eq.s32.totalorder %s21, 0
      %p104 = por %p102, %p103
      %s105 = ssub.s32 %s22, %s34
      %s106 = ssub.s32 %s23, %s30
      %s107 = sor.u32 %s105, %s106
      %p108 = scmp.eq.s32.totalorder %s107, 0
      %s110 = sadd.s32 %s109, 1
      %s111 = scalar_select %p108, %s109, %s110
      %p114 = pneg %p108
      %p115 = scmp.eq.s32.totalorder %s15, 15
      %p116 = por %p114, %p115
      %p117 = scmp.ne.s32.totalorder %s109, %s112
      %p118 = scmp.eq.s32.totalorder %s15, 0
      %p119 = por %p117, %p118
      %p120 = scmp.ne.s32.totalorder %s109, %s112
      %p121 = scmp.eq.s32.totalorder %s20, 15
      %p122 = por %p120, %p121
      %p123 = scmp.ne.s32.totalorder %s112, %s113
      %p124 = scmp.eq.s32.totalorder %s20, 0
      %p125 = por %p123, %p124
      %p126 = scmp.ne.s32.totalorder %s112, %s113
      %p127 = scmp.eq.s32.totalorder %s21, 15
      %p128 = por %p126, %p127
      %p130 = scmp.ne.s32.totalorder %s113, %s129
      %p131 = scmp.eq.s32.totalorder %s21, 0
      %p132 = por %p130, %p131
      %s133 = ssub.s32 %s22, %s34
      %p134 = scmp.eq.s32.totalorder %s133, 0
      %s136 = sadd.s32 %s135, 1
      %s137 = scalar_select %p134, %s135, %s136
      %p140 = pneg %p134
      %p141 = scmp.eq.s32.totalorder %s15, 15
      %p142 = por %p140, %p141
      %p143 = scmp.ne.s32.totalorder %s135, %s138
      %p144 = scmp.eq.s32.totalorder %s15, 0
      %p145 = por %p143, %p144
      %p146 = scmp.ne.s32.totalorder %s135, %s138
      %p147 = scmp.eq.s32.totalorder %s20, 15
      %p148 = por %p146, %p147
      %p149 = scmp.ne.s32.totalorder %s138, %s139
      %p150 = scmp.eq.s32.totalorder %s20, 0
      %p151 = por %p149, %p150
      %p152 = scmp.ne.s32.totalorder %s138, %s139
      %p153 = scmp.eq.s32.totalorder %s21, 15
      %p154 = por %p152, %p153
      %p156 = scmp.ne.s32.totalorder %s139, %s155
      %p157 = scmp.eq.s32.totalorder %s21, 0
      %p158 = por %p156, %p157
      %s159 = ssub.s32 %s22, %s34
      %p160 = scmp.eq.s32.totalorder %s159, 0
      %s162 = sadd.s32 %s161, 1
      %s163 = scalar_select %p160, %s161, %s162
      %p166 = pneg %p160
      %p167 = scmp.eq.s32.totalorder %s15, 15
      %p168 = por %p166, %p167
      %p169 = scmp.ne.s32.totalorder %s161, %s164
      %p170 = scmp.eq.s32.totalorder %s15, 0
      %p171 = por %p169, %p170
      %p172 = scmp.ne.s32.totalorder %s161, %s164
      %p173 = scmp.eq.s32.totalorder %s20, 15
      %p174 = por %p172, %p173
      %p175 = scmp.ne.s32.totalorder %s164, %s165
      %p176 = scmp.eq.s32.totalorder %s20, 0
      %p177 = por %p175, %p176
      %p178 = scmp.ne.s32.totalorder %s164, %s165
      %p179 = scmp.eq.s32.totalorder %s21, 15
      %p180 = por %p178, %p179
      %p182 = scmp.ne.s32.totalorder %s165, %s181
      %p183 = scmp.eq.s32.totalorder %s21, 0
      %p184 = por %p182, %p183
      %p185 = scmp.le.s32.totalorder 1, %s15
      %p186 = scmp.lt.s32.totalorder %s15, 17
      %p187 = pnand %p185, %p186
      %p188 = pneg %p187
      // Predicated region
      $region9: #{stacked_convlstm_forward.3} parent=5 // pred_check
        _
      $region10: #{stacked_convlstm_forward.3} parent=5 // pred_check_branch
        %190 = sbr.rel (%p187) target = $region12
      $region11: #{stacked_convlstm_forward.3} parent=5 // pred_region
        %s191 = ssub.s32 %s15, 1
        // Predicated region
        $region13: #{stacked_convlstm_forward.3} parent=11 // pred_check
          %p192 = pneg %p76
        $region14: #{stacked_convlstm_forward.3} parent=11 // pred_check_branch
          %194 = sbr.rel (%p192) target = $region16
        $region15: #{stacked_convlstm_forward.3} parent=11 // pred_region
          _
        $region16: #{stacked_convlstm_forward.3} parent=11 // pred_fallthru
          _
        // Predicated region
        $region17: #{stacked_convlstm_forward.3} parent=11 // pred_check
          %p195 = pneg %p97
        $region18: #{stacked_convlstm_forward.3} parent=11 // pred_check_branch
          %197 = sbr.rel (%p195) target = $region20
        $region19: #{stacked_convlstm_forward.3} parent=11 // pred_region
          _
        $region20: #{stacked_convlstm_forward.3} parent=11 // pred_fallthru
          _
      $region12: #{stacked_convlstm_forward.3} parent=5 // pred_fallthru
        _
      %p198 = scmp.lt.s32.totalorder %s15, 16
      // Predicated region
      $region21: #{stacked_convlstm_forward.3} parent=5 // pred_check
        %p199 = pneg %p198
      $region22: #{stacked_convlstm_forward.3} parent=5 // pred_check_branch
        %201 = sbr.rel (%p199) target = $region24
      $region23: #{stacked_convlstm_forward.3} parent=5 // pred_region
        // Predicated region
        $region25: #{stacked_convlstm_forward.3} parent=23 // pred_check
          %p202 = pneg %p49
        $region26: #{stacked_convlstm_forward.3} parent=23 // pred_check_branch
          %204 = sbr.rel (%p202) target = $region28
        $region27: #{stacked_convlstm_forward.3} parent=23 // pred_region
          %p205 = scmp.lt.s32.totalorder %s22, 1
          %s206 = scalar_select %p205, %s22, 1
          %p207 = scmp.lt.s32.totalorder %s23, 7
          %s208 = scalar_select %p207, %s23, 7
          %s209 = smul.addr %s208, 2
          %s210 = smul.addr %s206, 16
          %s211 = sadd.s32 %s209, %s210
          %s212 = smul.addr %s211, 4
          %s213 = scalar_lea.vmem %s0, %s212
        $region28: #{stacked_convlstm_forward.3} parent=23 // pred_fallthru
          _
      $region24: #{stacked_convlstm_forward.3} parent=5 // pred_fallthru
        _
      %p214 = scmp.le.s32.totalorder 1, %s15
      %p215 = scmp.lt.s32.totalorder %s15, 17
      %p216 = pnand %p214, %p215
      %p217 = pneg %p216
      // Predicated region
      $region29: #{stacked_convlstm_forward.3} parent=5 // pred_check
        _
      $region30: #{stacked_convlstm_forward.3} parent=5 // pred_check_branch
        %219 = sbr.rel (%p216) target = $region32
      $region31: #{stacked_convlstm_forward.3} parent=5 // pred_region
        %s220 = ssub.s32 %s15, 1
        %p221 = scmp.lt.s32.totalorder %s24, 1
        %s222 = scalar_select %p221, %s24, 1
        %p223 = scmp.lt.s32.totalorder %s25, 7
        %s224 = scalar_select %p223, %s25, 7
        %s225 = smul.addr %s224, 2
        %s226 = smul.addr %s222, 16
        %s227 = sadd.s32 %s225, %s226
        %s228 = smul.addr %s227, 4
        %s229 = scalar_lea.vmem %s0, %s228
        %p230 = pneg %p55
        %p231 = pneg %p52
        %p232 = pneg %p76
        %p233 = pneg %p73
        %p234 = pneg %p97
        %p235 = pneg %p94
        %p236 = pneg %p125
        %p237 = pneg %p122
        %s238 = sand.u32 %s112, 1
        %s239 = scalar_lea.sflag [#allocation3], %s238
        %s240 = sand.u32 %s112, 1
        %s241 = smul.addr %s240, 8
        %s242 = scalar_lea.vmem [#allocation2], %s241
        %p243 = pneg %p151
        %p244 = pneg %p148
        %p245 = scmp.lt.s32.totalorder %s24, 1
        %s246 = scalar_select %p245, %s24, 1
        %s247 = smul.addr %s246, 2
        %s248 = smul.addr %s247, 4
        %s249 = scalar_lea.vmem %s4, %s248
        %p250 = pneg %p177
        %p251 = pneg %p174
        %p252 = scmp.lt.s32.totalorder %s24, 1
        %s253 = scalar_select %p252, %s24, 1
        %s254 = smul.addr %s253, 2
        %s255 = smul.addr %s254, 4
        %s256 = scalar_lea.vmem %s5, %s255
        %p257 = scmp.lt.s32.totalorder %s24, 1
        %s258 = scalar_select %p257, %s24, 1
        %p259 = scmp.lt.s32.totalorder %s25, 7
        %s260 = scalar_select %p259, %s25, 7
        %s261 = smul.addr %s260, 2
        %s262 = smul.addr %s258, 16
        %s263 = sadd.s32 %s261, %s262
        %s264 = smul.addr %s263, 4
        %s265 = scalar_lea.vmem %s0, %s264
        %p266 = scmp.lt.s32.totalorder %s24, 1
        %s267 = scalar_select %p266, %s24, 1
        %s268 = smul.addr %s267, 2
        %s269 = smul.addr %s268, 4
        %s270 = scalar_lea.vmem %s4, %s269
        %p271 = scmp.lt.s32.totalorder %s24, 1
        %s272 = scalar_select %p271, %s24, 1
        %s273 = smul.addr %s272, 2
        %s274 = smul.addr %s273, 4
        %s275 = scalar_lea.vmem %s5, %s274
        %p276 = scmp.eq.s32.totalorder %s25, 0
        // Predicated region
        $region33: #{stacked_convlstm_forward.3} parent=31 // pred_check
          %p277 = pneg %p276
        $region34: #{stacked_convlstm_forward.3} parent=31 // pred_check_branch
          %279 = sbr.rel (%p277) target = $region36
        $region35: #{stacked_convlstm_forward.3} parent=31 // pred_region
          %280 = vst [vmem:[%s270] sm:$0xff] 0.0
          %281 = vst [vmem:[%s275] sm:$0xff] 0.0
        $region36: #{stacked_convlstm_forward.3} parent=31 // pred_fallthru
          _
        %v282 = vld [vmem:[%s265] sm:$0xff]
        %v283 = vld [vmem:[%s270] sm:$0xff]
        %v285 = vcombine.high %v282, %v282
        %v288 = vcombine.low %v283, %v283
        %vm290 = vcmask 1043456
        %v291 = vsel %vm290, %v282, %v288
        %v292 = vsel %vm290, %v285, %v283
        %v293 = vlaneseq
        %v294 = vand.u32 %v293, 127
        %v295 = vadd.s32 %v294, 128
        %vm296 = vcmp.lt.s32.totalorder %v294, 0
        %v297 = vsub.s32 0, %v294
        %v298 = vsel %vm296, %v297, %v294
        %v299 = vshrl.u32 %v298, 4
        %v300 = vand.u32 %v298, 15
        %v301 = vsub.s32 0, %v300
        %v302 = vsel %vm296, %v301, %v300
        %vm303 = vcmp.lt.s32.totalorder %v295, 0
        %v304 = vsub.s32 0, %v295
        %v305 = vsel %vm303, %v304, %v295
        %v306 = vshrl.u32 %v305, 4
        %v307 = vand.u32 %v305, 15
        %v308 = vsub.s32 0, %v307
        %v309 = vsel %vm303, %v308, %v307
        %vm310 = vcmp.ne.s32.totalorder %v302, 0
        %vm311 = vcmp.ne.s32.totalorder %v309, 0
        %vm312 = vcmp.lt.s32.totalorder %v302, 0
        %vm313 = vcmp.lt.s32.totalorder %v309, 0
        %vm314 = vmand %vm312, %vm310
        %vm315 = vmand %vm313, %vm311
        %v316 = vadd.s32 %v302, 16
        %v317 = vadd.s32 %v309, 16
        %v318 = vsel %vm314, %v316, %v302
        %v319 = vsel %vm315, %v317, %v309
        %322 = vrot.lane.b32.xlu0 %v291, 17
        %v323 = vpop.permute.xlu0 %322
        %324 = vrot.lane.b32.xlu0 %v292, 17
        %v325 = vpop.permute.xlu0 %324
        %vm326 = vcmask 138240
        %v327 = vsel %vm326, %v323, %v325
        %v330 = vsel %vm326, 0.0, %v323
        %vm331 = vcmp.ge.s32.totalorder %v318, 1
        %vm332 = vcmp.ge.s32.totalorder %v319, 1
        %v333 = vsel %vm331, %v330, 0.0
        %v334 = vsel %vm332, %v327, 0.0
        %335 = vrot.lane.b32.xlu0 %v291, 16
        %v336 = vpop.permute.xlu0 %335
        %337 = vrot.lane.b32.xlu0 %v292, 16
        %v338 = vpop.permute.xlu0 %337
        %vm339 = vcmask 130048
        %v340 = vsel %vm339, %v336, %v338
        %v343 = vsel %vm339, 0.0, %v336
        %344 = vrot.lane.b32.xlu0 %v291, 15
        %v345 = vpop.permute.xlu0 %344
        %346 = vrot.lane.b32.xlu0 %v292, 15
        %v347 = vpop.permute.xlu0 %346
        %vm348 = vcmask 121856
        %v349 = vsel %vm348, %v345, %v347
        %v352 = vsel %vm348, 0.0, %v345
        %vm353 = vcmp.lt.s32.totalorder %v318, 15
        %vm354 = vcmp.lt.s32.totalorder %v319, 15
        %v355 = vsel %vm353, %v352, 0.0
        %v356 = vsel %vm354, %v349, 0.0
        %357 = vrot.lane.b32.xlu0 %v291, 1
        %v358 = vpop.permute.xlu0 %357
        %359 = vrot.lane.b32.xlu0 %v292, 1
        %v360 = vpop.permute.xlu0 %359
        %vm361 = vcmask 7168
        %v362 = vsel %vm361, %v358, %v360
        %v365 = vsel %vm361, 0.0, %v358
        %v366 = vsel %vm331, %v365, 0.0
        %v367 = vsel %vm332, %v362, 0.0
        %368 = vrot.lane.b32.xlu0 %v291, 127
        %v369 = vpop.permute.xlu0 %368
        %370 = vrot.lane.b32.xlu0 %v292, 127
        %v371 = vpop.permute.xlu0 %370
        %vm372 = vcmask 1039360
        %v373 = vsel %vm372, %v369, %v371
        %v376 = vsel %vm372, %v371, 0.0
        %v377 = vsel %vm353, %v373, 0.0
        %v378 = vsel %vm354, %v376, 0.0
        %379 = vrot.lane.b32.xlu0 %v291, 113
        %v380 = vpop.permute.xlu0 %379
        %381 = vrot.lane.b32.xlu0 %v292, 113
        %v382 = vpop.permute.xlu0 %381
        %vm383 = vcmask 924672
        %v384 = vsel %vm383, %v380, %v382
        %v387 = vsel %vm383, %v382, 0.0
        %v388 = vsel %vm331, %v384, 0.0
        %v389 = vsel %vm332, %v387, 0.0
        %390 = vrot.lane.b32.xlu0 %v291, 112
        %v391 = vpop.permute.xlu0 %390
        %392 = vrot.lane.b32.xlu0 %v292, 112
        %v393 = vpop.permute.xlu0 %392
        %vm394 = vcmask 916480
        %v395 = vsel %vm394, %v391, %v393
        %v398 = vsel %vm394, %v393, 0.0
        %399 = vrot.lane.b32.xlu0 %v291, 111
        %v400 = vpop.permute.xlu0 %399
        %401 = vrot.lane.b32.xlu0 %v292, 111
        %v402 = vpop.permute.xlu0 %401
        %vm403 = vcmask 908288
        %v404 = vsel %vm403, %v400, %v402
        %v407 = vsel %vm403, %v402, 0.0
        %v408 = vsel %vm353, %v404, 0.0
        %v409 = vsel %vm354, %v407, 0.0
        %v410 = vld [vmem:[%s1] sm:$0xff]
        %v411 = vld [vmem:[%s1 + $0x8] sm:$0xff]
        %v412 = vld [vmem:[%s2] sm:$0xff]
        %v413 = vld [vmem:[%s2 + $0x8] sm:$0xff]
        %415 = vset.pattern.permute.xlu0 0
        %416 = vperm.xlu0 %415, %v412
        %v417 = vpop.permute.xlu0 %416
        %420 = vset.pattern.permute.xlu0 0
        %421 = vperm.xlu0 %420, %v413
        %v422 = vpop.permute.xlu0 %421
        %vm424 = vcmask 588800
        %v426 = vsel %vm424, %v410, 0
        %v429 = vsel %vm424, %v411, 0
        %431 = vmatprep.subr.mxu0 0.0
        %432 = vmatpush1.msra.mxu0 0.0
        %433 = vmatprep.subr.mxu0 0.0
        %434 = vmatpush1.msra.mxu0 0.0
        %435 = vmatprep.subr.mxu0 0.0
        %436 = vmatpush1.msra.mxu0 0.0
        %437 = vmatprep.subr.mxu0 0.0
        %438 = vmatpush1.msra.mxu0 0.0
        %439 = vmatprep.subr.mxu0 0.0
        %440 = vmatpush1.msra.mxu0 0.0
        %441 = vmatprep.subr.mxu0 0.0
        %442 = vmatpush1.msra.mxu0 0.0
        %443 = vmatprep.subr.mxu0 0.0
        %444 = vmatpush1.msra.mxu0 0.0
        %445 = vmatprep.subr.mxu0 %v409
        %446 = vmatpush1.msra.mxu0 %v408
        %447 = vmatprep.subr.mxu0 %v398
        %448 = vmatpush1.msra.mxu0 %v395
        %449 = vmatprep.subr.mxu0 %v389
        %450 = vmatpush1.msra.mxu0 %v388
        %451 = vmatprep.subr.mxu0 %v378
        %452 = vmatpush1.msra.mxu0 %v377
        %453 = vmatprep.subr.mxu0 %v292
        %454 = vmatpush1.msra.mxu0 %v291
        %455 = vmatprep.subr.mxu0 %v367
        %456 = vmatpush1.msra.mxu0 %v366
        %457 = vmatprep.subr.mxu0 %v356
        %458 = vmatpush1.msra.mxu0 %v355
        %459 = vmatprep.subr.mxu0 %v340
        %460 = vmatpush1.msra.mxu0 %v343
        %461 = vmatprep.subr.mxu0 %v334
        %462 = vmatpush1.msra.mxu0 %v333
        %463 = vmatprep.subr.mxu0 0.0
        %464 = vmatpush2.msra.mxu0 0.0
        %465 = vmatprep.subr.mxu0 0.0
        %466 = vmatpush2.msra.mxu0 0.0
        %467 = vmatprep.subr.mxu0 0.0
        %468 = vmatpush2.msra.mxu0 0.0
        %469 = vmatprep.subr.mxu0 0.0
        %470 = vmatpush2.msra.mxu0 0.0
        %471 = vmatprep.subr.mxu0 0.0
        %472 = vmatpush2.msra.mxu0 0.0
        %473 = vmatprep.subr.mxu0 0.0
        %474 = vmatpush2.msra.mxu0 0.0
        %475 = vmatprep.subr.mxu0 0.0
        %476 = vmatpush2.msra.mxu0 0.0
        %477 = vmatprep.subr.mxu0 0.0
        %478 = vmatpush2.msra.mxu0 0.0
        %479 = vmatprep.subr.mxu0 0.0
        %480 = vmatpush2.msra.mxu0 0.0
        %481 = vmatprep.subr.mxu0 0.0
        %482 = vmatpush2.msra.mxu0 0.0
        %483 = vmatprep.subr.mxu0 0.0
        %484 = vmatpush2.msra.mxu0 0.0
        %485 = vmatprep.subr.mxu0 0.0
        %486 = vmatpush2.msra.mxu0 0.0
        %487 = vmatprep.subr.mxu0 0.0
        %488 = vmatpush2.msra.mxu0 0.0
        %489 = vmatprep.subr.mxu0 0.0
        %490 = vmatpush2.msra.mxu0 0.0
        %491 = vmatprep.subr.mxu0 0.0
        %492 = vmatpush2.msra.mxu0 0.0
        %493 = vmatprep.subr.mxu0 0.0
        %494 = vmatpush2.msra.mxu0 0.0
        %495 = vmatprep.mubr.f32.mxu0 0.0
        %496 = vmatmul.mubr.f32.gmra.mxu0 %v426
        %v497 = vpop.f32.mrf.mxu0
        %v498 = vadd.f32 %v417, %v497
        %v499 = vpop.f32.mrf.mxu0
        %v500 = vadd.f32 %v417, %v499
        %501 = vmatprep.mubr.f32.mxu0 0.0
        %502 = vmatmul.mubr.f32.gmra.mxu0 %v429
        %v503 = vpop.f32.mrf.mxu0
        %v504 = vadd.f32 %v422, %v503
        %v505 = vpop.f32.mrf.mxu0
        %v506 = vadd.f32 %v422, %v505
        %507 = vdwg.mxu0
        %v508 = vxor.u32 %v498, 2147483648
        %v509 = vxor.u32 %v500, 2147483648
        %v510 = vmul.f32 %v508, 1.442695
        %v511 = vpow.pop %v510
        %v512 = vmul.f32 %v509, 1.442695
        %v513 = vpow.pop %v512
        %v514 = vadd.f32 %v511, 1.0
        %v515 = vadd.f32 %v513, 1.0
        %v516 = vrcp.pop %v514
        %v517 = vmul.f32 1.0, %v516
        %v518 = vrcp.pop %v515
        %v519 = vmul.f32 1.0, %v518
        %v520 = vtanh.pop %v504
        %v521 = vtanh.pop %v506
        %v522 = vxor.u32 %v504, 2147483648
        %v523 = vxor.u32 %v506, 2147483648
        %v524 = vmul.f32 %v522, 1.442695
        %v525 = vpow.pop %v524
        %v526 = vmul.f32 %v523, 1.442695
        %v527 = vpow.pop %v526
        %v528 = vadd.f32 %v525, 1.0
        %v529 = vadd.f32 %v527, 1.0
        %v530 = vrcp.pop %v528
        %v531 = vmul.f32 1.0, %v530
        %v532 = vrcp.pop %v529
        %v533 = vmul.f32 1.0, %v532
        %v534 = vld [vmem:[%s275] sm:$0xff]
        %v536 = vcombine.low %v534, %v534
        %v538 = vmul.f32 %v517, %v536
        %v539 = vmul.f32 %v519, %v534
        %v540 = vmul.f32 %v517, %v520
        %v541 = vmul.f32 %v519, %v521
        %v544 = vrot.slane %v540, 4
        %v545 = vrot.slane %v541, 4
        %v548 = vadd.f32 %v538, %v544
        %v549 = vadd.f32 %v539, %v545
        %v550 = vtanh.pop %v548
        %v551 = vtanh.pop %v549
        %v552 = vmul.f32 %v531, %v550
        %v553 = vmul.f32 %v533, %v551
        %v556 = vcombine.high %v552, %v553
        %558 = vst [vmem:[%s270] sm:$0xff] %v556
        %v561 = vcombine.high %v548, %v549
        %563 = vst [vmem:[%s275] sm:$0xff] %v561
        %564 = vst [vmem:[%s242] sm:$0xff] %v556
        %s565 = sand.u32 %s112, 1
        %s566 = scalar_lea.sflag [#allocation3], %s565
        %s567 = sand.u32 %s112, 1
        %s568 = smul.addr %s567, 8
        %s569 = scalar_lea.vmem [#allocation2], %s568
        %p570 = scmp.lt.s32.totalorder %s24, 1
        %s571 = scalar_select %p570, %s24, 1
        %s572 = smul.addr %s571, 2
        %s573 = smul.addr %s572, 4
        %s574 = scalar_lea.vmem %s4, %s573
        %p575 = scmp.lt.s32.totalorder %s24, 1
        %s576 = scalar_select %p575, %s24, 1
        %s577 = smul.addr %s576, 2
        %s578 = smul.addr %s577, 4
        %s579 = scalar_lea.vmem %s5, %s578
        // Predicated region
        $region37: #{stacked_convlstm_forward.3} parent=31 // pred_check
          %p580 = pneg %p122
        $region38: #{stacked_convlstm_forward.3} parent=31 // pred_check_branch
          %582 = sbr.rel (%p580) target = $region40
        $region39: #{stacked_convlstm_forward.3} parent=31 // pred_region
          %s584 = ssub.s32 128, 128
          %585 = vsyncadd %s566, %s584
          %s586 = smul.addr %s25, 2
          %s587 = smul.addr %s24, 16
          %s588 = sadd.s32 %s586, %s587
          %s589 = smul.addr %s588, 64
          %s590 = scalar_lea.hbm %s3, %s589
          %s592 = sshll.u32 %s569, 4
          %s593 = int_to_ptr.vmem [resolvable:$true] %s592
          %595 = dma.vmem_to_hbm [thread:$0]  %s593, 128, %s590, %s566
        $region40: #{stacked_convlstm_forward.3} parent=31 // pred_fallthru
          _
        // Predicated region
        $region41: #{stacked_convlstm_forward.3} parent=31 // pred_check
          %p596 = pneg %p148
        $region42: #{stacked_convlstm_forward.3} parent=31 // pred_check_branch
          %598 = sbr.rel (%p596) target = $region44
        $region43: #{stacked_convlstm_forward.3} parent=31 // pred_region
          _
        $region44: #{stacked_convlstm_forward.3} parent=31 // pred_fallthru
          _
        // Predicated region
        $region45: #{stacked_convlstm_forward.3} parent=31 // pred_check
          %p599 = pneg %p174
        $region46: #{stacked_convlstm_forward.3} parent=31 // pred_check_branch
          %601 = sbr.rel (%p599) target = $region48
        $region47: #{stacked_convlstm_forward.3} parent=31 // pred_region
          _
        $region48: #{stacked_convlstm_forward.3} parent=31 // pred_fallthru
          _
      $region32: #{stacked_convlstm_forward.3} parent=5 // pred_fallthru
        _
      %p602 = scmp.le.s32.totalorder 2, %s15
      // Predicated region
      $region49: #{stacked_convlstm_forward.3} parent=5 // pred_check
        %p603 = pneg %p602
      $region50: #{stacked_convlstm_forward.3} parent=5 // pred_check_branch
        %605 = sbr.rel (%p603) target = $region52
      $region51: #{stacked_convlstm_forward.3} parent=5 // pred_region
        %s606 = ssub.s32 %s15, 2
        // Predicated region
        $region53: #{stacked_convlstm_forward.3} parent=51 // pred_check
          %p607 = pneg %p128
        $region54: #{stacked_convlstm_forward.3} parent=51 // pred_check_branch
          %609 = sbr.rel (%p607) target = $region56
        $region55: #{stacked_convlstm_forward.3} parent=51 // pred_region
          %s610 = sand.u32 %s113, 1
          %s611 = scalar_lea.sflag [#allocation3], %s610
          %s612 = sand.u32 %s113, 1
          %s613 = smul.addr %s612, 8
          %s614 = scalar_lea.vmem [#allocation2], %s613
          %615 = dma.done %s611, 128
        $region56: #{stacked_convlstm_forward.3} parent=51 // pred_fallthru
          _
        // Predicated region
        $region57: #{stacked_convlstm_forward.3} parent=51 // pred_check
          %p616 = pneg %p154
        $region58: #{stacked_convlstm_forward.3} parent=51 // pred_check_branch
          %618 = sbr.rel (%p616) target = $region60
        $region59: #{stacked_convlstm_forward.3} parent=51 // pred_region
          %p619 = scmp.lt.s32.totalorder %s26, 1
          %s620 = scalar_select %p619, %s26, 1
          %s621 = smul.addr %s620, 2
          %s622 = smul.addr %s621, 4
          %s623 = scalar_lea.vmem %s4, %s622
        $region60: #{stacked_convlstm_forward.3} parent=51 // pred_fallthru
          _
        // Predicated region
        $region61: #{stacked_convlstm_forward.3} parent=51 // pred_check
          %p624 = pneg %p180
        $region62: #{stacked_convlstm_forward.3} parent=51 // pred_check_branch
          %626 = sbr.rel (%p624) target = $region64
        $region63: #{stacked_convlstm_forward.3} parent=51 // pred_region
          %p627 = scmp.lt.s32.totalorder %s26, 1
          %s628 = scalar_select %p627, %s26, 1
          %s629 = smul.addr %s628, 2
          %s630 = smul.addr %s629, 4
          %s631 = scalar_lea.vmem %s5, %s630
        $region64: #{stacked_convlstm_forward.3} parent=51 // pred_fallthru
          _
      $region52: #{stacked_convlstm_forward.3} parent=5 // pred_fallthru
        _
    $region6: #{stacked_convlstm_forward.3} parent=1 // loop_footer
      %s19 = sadd.s32 1, %s15
    $region7: #{stacked_convlstm_forward.3} parent=1 // loop_footer_branch
      %14 = sbr.rel target = $region3
    $region8: #{stacked_convlstm_forward.3} parent=1 // loop_exit
      _
    %632 = vsyncpa [#allocation3], 1
    %s633 = scalar_lea.sflag [#allocation3], 1
    %634 = vsyncpa %s633, 1

// kernel: stacked_convlstm_forward.2
$region0: #{stacked_convlstm_forward.2}
  #allocation0 [shape = 'u32[]', space=smem, size = 0x4, offset = 0x4, fixed_abs, tag = 'smem constant byte address 0x4 - core index']
  #allocation1 [shape = 'u32[144,128]{1,0:T(1,128)}', space=vmem, size = 0x12000, scoped, tag = 'internal scratch']
  %s0 = inlined_call_operand.vmem [shape: f32[2,8,4,256], index: 0, kind: input, shape index: {}]
  %s1 = inlined_call_operand.vmem [shape: f32[16,72], index: 1, kind: input, shape index: {}]
  %s2 = inlined_call_operand.vmem [shape: f32[16,1], index: 2, kind: input, shape index: {}]
  %s3 = inlined_call_operand.vmem [shape: f32[2,8,4,256], index: 3, kind: output, shape index: {0}]
  %s4 = inlined_call_operand.vmem [shape: f32[2,4,256], index: 4, kind: output, shape index: {1}]
  %s5 = inlined_call_operand.vmem [shape: f32[2,4,256], index: 5, kind: output, shape index: {2}]
  %6 = xla_tuple %s3, %s4, %s5
  %s7 = sld [smem:[#allocation0]]
  $region65: #{stacked_convlstm_forward.2} parent=0
    _
  %s9 = ssub.s32 1, %s7
  %s10 = scalar_select 0, %s9, %s7
  loop: start=0, step=1, limit=18
  $region2: #{stacked_convlstm_forward.2} parent=0 // loop_pre_header
    _
  $region3: #{stacked_convlstm_forward.2} parent=0 // loop_header
    %s12 = sphi 0, %s16
    %p13 = scmp.ge.s32.totalorder %s12, 18
    %s19 = sphi 0, %s31
    %s20 = sphi 0, %s27
    %s21 = sphi 0, %s19
    %s22 = sphi 0, %s20
    %s23 = sphi 0, %s21
    %s24 = sphi 0, %s22
    %s36 = sphi 0, %s38
    %s39 = sphi 0, %s36
    %s40 = sphi 0, %s39
    %s56 = sphi 0, %s40
    %s60 = sphi 0, %s60
    %s62 = sphi 0, %s60
    %s63 = sphi 0, %s62
    %s77 = sphi 0, %s63
    %s81 = sphi 0, %s81
    %s83 = sphi 0, %s81
    %s84 = sphi 0, %s83
    %s98 = sphi 0, %s84
    %s106 = sphi 0, %s108
    %s109 = sphi 0, %s106
    %s110 = sphi 0, %s109
    %s126 = sphi 0, %s110
    %s132 = sphi 0, %s134
    %s135 = sphi 0, %s132
    %s136 = sphi 0, %s135
    %s152 = sphi 0, %s136
    %s158 = sphi 0, %s160
    %s161 = sphi 0, %s158
    %s162 = sphi 0, %s161
    %s178 = sphi 0, %s162
  $region4: #{stacked_convlstm_forward.2} parent=0 // loop_header_branch
    %15 = sbr.rel (%p13) target = $region8
  $region5: #{stacked_convlstm_forward.2} parent=0 // loop_body
    %s17 = ssub.s32 %s12, 1
    %s18 = ssub.s32 %s12, 2
    %s25 = sadd.s32 1, %s20
    %p26 = scmp.ge.s32.totalorder %s25, 8
    %s27 = scalar_select %p26, 0, %s25
    %s28 = sadd.s32 1, %s19
    %s29 = scalar_select %p26, %s28, %s19
    %p30 = scmp.ge.s32.totalorder %s29, 2
    %s31 = scalar_select %p30, 0, %s29
    %s32 = ssub.s32 %s19, %s31
    %s33 = ssub.s32 %s20, %s27
    %s34 = sor.u32 %s32, %s33
    %p35 = scmp.eq.s32.totalorder %s34, 0
    %s37 = sadd.s32 %s36, 1
    %s38 = scalar_select %p35, %s36, %s37
    %p41 = pneg %p35
    %p42 = scmp.eq.s32.totalorder %s12, 15
    %p43 = por %p41, %p42
    %p44 = scmp.ne.s32.totalorder %s36, %s39
    %p45 = scmp.eq.s32.totalorder %s12, 0
    %p46 = por %p44, %p45
    %p47 = scmp.ne.s32.totalorder %s36, %s39
    %p48 = scmp.eq.s32.totalorder %s17, 15
    %p49 = por %p47, %p48
    %p50 = scmp.ne.s32.totalorder %s39, %s40
    %p51 = scmp.eq.s32.totalorder %s17, 0
    %p52 = por %p50, %p51
    %p53 = scmp.ne.s32.totalorder %s39, %s40
    %p54 = scmp.eq.s32.totalorder %s18, 15
    %p55 = por %p53, %p54
    %p57 = scmp.ne.s32.totalorder %s40, %s56
    %p58 = scmp.eq.s32.totalorder %s18, 0
    %p59 = por %p57, %p58
    %s61 = sadd.s32 %s60, 1
    %p64 = scmp.eq.s32.totalorder %s12, 15
    %p65 = scmp.ne.s32.totalorder %s60, %s62
    %p66 = scmp.eq.s32.totalorder %s12, 0
    %p67 = por %p65, %p66
    %p68 = scmp.ne.s32.totalorder %s60, %s62
    %p69 = scmp.eq.s32.totalorder %s17, 15
    %p70 = por %p68, %p69
    %p71 = scmp.ne.s32.totalorder %s62, %s63
    %p72 = scmp.eq.s32.totalorder %s17, 0
    %p73 = por %p71, %p72
    %p74 = scmp.ne.s32.totalorder %s62, %s63
    %p75 = scmp.eq.s32.totalorder %s18, 15
    %p76 = por %p74, %p75
    %p78 = scmp.ne.s32.totalorder %s63, %s77
    %p79 = scmp.eq.s32.totalorder %s18, 0
    %p80 = por %p78, %p79
    %s82 = sadd.s32 %s81, 1
    %p85 = scmp.eq.s32.totalorder %s12, 15
    %p86 = scmp.ne.s32.totalorder %s81, %s83
    %p87 = scmp.eq.s32.totalorder %s12, 0
    %p88 = por %p86, %p87
    %p89 = scmp.ne.s32.totalorder %s81, %s83
    %p90 = scmp.eq.s32.totalorder %s17, 15
    %p91 = por %p89, %p90
    %p92 = scmp.ne.s32.totalorder %s83, %s84
    %p93 = scmp.eq.s32.totalorder %s17, 0
    %p94 = por %p92, %p93
    %p95 = scmp.ne.s32.totalorder %s83, %s84
    %p96 = scmp.eq.s32.totalorder %s18, 15
    %p97 = por %p95, %p96
    %p99 = scmp.ne.s32.totalorder %s84, %s98
    %p100 = scmp.eq.s32.totalorder %s18, 0
    %p101 = por %p99, %p100
    %s102 = ssub.s32 %s19, %s31
    %s103 = ssub.s32 %s20, %s27
    %s104 = sor.u32 %s102, %s103
    %p105 = scmp.eq.s32.totalorder %s104, 0
    %s107 = sadd.s32 %s106, 1
    %s108 = scalar_select %p105, %s106, %s107
    %p111 = pneg %p105
    %p112 = scmp.eq.s32.totalorder %s12, 15
    %p113 = por %p111, %p112
    %p114 = scmp.ne.s32.totalorder %s106, %s109
    %p115 = scmp.eq.s32.totalorder %s12, 0
    %p116 = por %p114, %p115
    %p117 = scmp.ne.s32.totalorder %s106, %s109
    %p118 = scmp.eq.s32.totalorder %s17, 15
    %p119 = por %p117, %p118
    %p120 = scmp.ne.s32.totalorder %s109, %s110
    %p121 = scmp.eq.s32.totalorder %s17, 0
    %p122 = por %p120, %p121
    %p123 = scmp.ne.s32.totalorder %s109, %s110
    %p124 = scmp.eq.s32.totalorder %s18, 15
    %p125 = por %p123, %p124
    %p127 = scmp.ne.s32.totalorder %s110, %s126
    %p128 = scmp.eq.s32.totalorder %s18, 0
    %p129 = por %p127, %p128
    %s130 = ssub.s32 %s19, %s31
    %p131 = scmp.eq.s32.totalorder %s130, 0
    %s133 = sadd.s32 %s132, 1
    %s134 = scalar_select %p131, %s132, %s133
    %p137 = pneg %p131
    %p138 = scmp.eq.s32.totalorder %s12, 15
    %p139 = por %p137, %p138
    %p140 = scmp.ne.s32.totalorder %s132, %s135
    %p141 = scmp.eq.s32.totalorder %s12, 0
    %p142 = por %p140, %p141
    %p143 = scmp.ne.s32.totalorder %s132, %s135
    %p144 = scmp.eq.s32.totalorder %s17, 15
    %p145 = por %p143, %p144
    %p146 = scmp.ne.s32.totalorder %s135, %s136
    %p147 = scmp.eq.s32.totalorder %s17, 0
    %p148 = por %p146, %p147
    %p149 = scmp.ne.s32.totalorder %s135, %s136
    %p150 = scmp.eq.s32.totalorder %s18, 15
    %p151 = por %p149, %p150
    %p153 = scmp.ne.s32.totalorder %s136, %s152
    %p154 = scmp.eq.s32.totalorder %s18, 0
    %p155 = por %p153, %p154
    %s156 = ssub.s32 %s19, %s31
    %p157 = scmp.eq.s32.totalorder %s156, 0
    %s159 = sadd.s32 %s158, 1
    %s160 = scalar_select %p157, %s158, %s159
    %p163 = pneg %p157
    %p164 = scmp.eq.s32.totalorder %s12, 15
    %p165 = por %p163, %p164
    %p166 = scmp.ne.s32.totalorder %s158, %s161
    %p167 = scmp.eq.s32.totalorder %s12, 0
    %p168 = por %p166, %p167
    %p169 = scmp.ne.s32.totalorder %s158, %s161
    %p170 = scmp.eq.s32.totalorder %s17, 15
    %p171 = por %p169, %p170
    %p172 = scmp.ne.s32.totalorder %s161, %s162
    %p173 = scmp.eq.s32.totalorder %s17, 0
    %p174 = por %p172, %p173
    %p175 = scmp.ne.s32.totalorder %s161, %s162
    %p176 = scmp.eq.s32.totalorder %s18, 15
    %p177 = por %p175, %p176
    %p179 = scmp.ne.s32.totalorder %s162, %s178
    %p180 = scmp.eq.s32.totalorder %s18, 0
    %p181 = por %p179, %p180
    %p182 = scmp.le.s32.totalorder 1, %s12
    %p183 = scmp.lt.s32.totalorder %s12, 17
    %p184 = pnand %p182, %p183
    %p185 = pneg %p184
    // Predicated region
    $region9: #{stacked_convlstm_forward.2} parent=5 // pred_check
      _
    $region10: #{stacked_convlstm_forward.2} parent=5 // pred_check_branch
      %187 = sbr.rel (%p184) target = $region12
    $region11: #{stacked_convlstm_forward.2} parent=5 // pred_region
      %s188 = ssub.s32 %s12, 1
      // Predicated region
      $region13: #{stacked_convlstm_forward.2} parent=11 // pred_check
        %p189 = pneg %p73
      $region14: #{stacked_convlstm_forward.2} parent=11 // pred_check_branch
        %191 = sbr.rel (%p189) target = $region16
      $region15: #{stacked_convlstm_forward.2} parent=11 // pred_region
        _
      $region16: #{stacked_convlstm_forward.2} parent=11 // pred_fallthru
        _
      // Predicated region
      $region17: #{stacked_convlstm_forward.2} parent=11 // pred_check
        %p192 = pneg %p94
      $region18: #{stacked_convlstm_forward.2} parent=11 // pred_check_branch
        %194 = sbr.rel (%p192) target = $region20
      $region19: #{stacked_convlstm_forward.2} parent=11 // pred_region
        _
      $region20: #{stacked_convlstm_forward.2} parent=11 // pred_fallthru
        _
    $region12: #{stacked_convlstm_forward.2} parent=5 // pred_fallthru
      _
    %p195 = scmp.lt.s32.totalorder %s12, 16
    // Predicated region
    $region21: #{stacked_convlstm_forward.2} parent=5 // pred_check
      %p196 = pneg %p195
    $region22: #{stacked_convlstm_forward.2} parent=5 // pred_check_branch
      %198 = sbr.rel (%p196) target = $region24
    $region23: #{stacked_convlstm_forward.2} parent=5 // pred_region
      // Predicated region
      $region25: #{stacked_convlstm_forward.2} parent=23 // pred_check
        %p199 = pneg %p46
      $region26: #{stacked_convlstm_forward.2} parent=23 // pred_check_branch
        %201 = sbr.rel (%p199) target = $region28
      $region27: #{stacked_convlstm_forward.2} parent=23 // pred_region
        %p202 = scmp.lt.s32.totalorder %s19, 1
        %s203 = scalar_select %p202, %s19, 1
        %p204 = scmp.lt.s32.totalorder %s20, 7
        %s205 = scalar_select %p204, %s20, 7
        %s206 = smul.addr %s205, 2
        %s207 = smul.addr %s203, 16
        %s208 = sadd.s32 %s206, %s207
        %s209 = smul.addr %s208, 4
        %s210 = scalar_lea.vmem %s0, %s209
      $region28: #{stacked_convlstm_forward.2} parent=23 // pred_fallthru
        _
    $region24: #{stacked_convlstm_forward.2} parent=5 // pred_fallthru
      _
    %p211 = scmp.le.s32.totalorder 1, %s12
    %p212 = scmp.lt.s32.totalorder %s12, 17
    %p213 = pnand %p211, %p212
    %p214 = pneg %p213
    // Predicated region
    $region29: #{stacked_convlstm_forward.2} parent=5 // pred_check
      _
    $region30: #{stacked_convlstm_forward.2} parent=5 // pred_check_branch
      %216 = sbr.rel (%p213) target = $region32
    $region31: #{stacked_convlstm_forward.2} parent=5 // pred_region
      %s217 = ssub.s32 %s12, 1
      %p218 = scmp.lt.s32.totalorder %s21, 1
      %s219 = scalar_select %p218, %s21, 1
      %p220 = scmp.lt.s32.totalorder %s22, 7
      %s221 = scalar_select %p220, %s22, 7
      %s222 = smul.addr %s221, 2
      %s223 = smul.addr %s219, 16
      %s224 = sadd.s32 %s222, %s223
      %s225 = smul.addr %s224, 4
      %s226 = scalar_lea.vmem %s0, %s225
      %p227 = pneg %p52
      %p228 = pneg %p49
      %p229 = pneg %p73
      %p230 = pneg %p70
      %p231 = pneg %p94
      %p232 = pneg %p91
      %p233 = pneg %p122
      %p234 = pneg %p119
      %p235 = scmp.lt.s32.totalorder %s21, 1
      %s236 = scalar_select %p235, %s21, 1
      %p237 = scmp.lt.s32.totalorder %s22, 7
      %s238 = scalar_select %p237, %s22, 7
      %s239 = smul.addr %s238, 2
      %s240 = smul.addr %s236, 16
      %s241 = sadd.s32 %s239, %s240
      %s242 = smul.addr %s241, 4
      %s243 = scalar_lea.vmem %s3, %s242
      %p244 = pneg %p148
      %p245 = pneg %p145
      %p246 = scmp.lt.s32.totalorder %s21, 1
      %s247 = scalar_select %p246, %s21, 1
      %s248 = smul.addr %s247, 2
      %s249 = smul.addr %s248, 4
      %s250 = scalar_lea.vmem %s4, %s249
      %p251 = pneg %p174
      %p252 = pneg %p171
      %p253 = scmp.lt.s32.totalorder %s21, 1
      %s254 = scalar_select %p253, %s21, 1
      %s255 = smul.addr %s254, 2
      %s256 = smul.addr %s255, 4
      %s257 = scalar_lea.vmem %s5, %s256
      %p258 = scmp.lt.s32.totalorder %s21, 1
      %s259 = scalar_select %p258, %s21, 1
      %p260 = scmp.lt.s32.totalorder %s22, 7
      %s261 = scalar_select %p260, %s22, 7
      %s262 = smul.addr %s261, 2
      %s263 = smul.addr %s259, 16
      %s264 = sadd.s32 %s262, %s263
      %s265 = smul.addr %s264, 4
      %s266 = scalar_lea.vmem %s0, %s265
      %p267 = scmp.lt.s32.totalorder %s21, 1
      %s268 = scalar_select %p267, %s21, 1
      %p269 = scmp.lt.s32.totalorder %s22, 7
      %s270 = scalar_select %p269, %s22, 7
      %s271 = smul.addr %s270, 2
      %s272 = smul.addr %s268, 16
      %s273 = sadd.s32 %s271, %s272
      %s274 = smul.addr %s273, 4
      %s275 = scalar_lea.vmem %s3, %s274
      %p276 = scmp.lt.s32.totalorder %s21, 1
      %s277 = scalar_select %p276, %s21, 1
      %s278 = smul.addr %s277, 2
      %s279 = smul.addr %s278, 4
      %s280 = scalar_lea.vmem %s4, %s279
      %p281 = scmp.lt.s32.totalorder %s21, 1
      %s282 = scalar_select %p281, %s21, 1
      %s283 = smul.addr %s282, 2
      %s284 = smul.addr %s283, 4
      %s285 = scalar_lea.vmem %s5, %s284
      %p286 = scmp.eq.s32.totalorder %s22, 0
      // Predicated region
      $region33: #{stacked_convlstm_forward.2} parent=31 // pred_check
        %p287 = pneg %p286
      $region34: #{stacked_convlstm_forward.2} parent=31 // pred_check_branch
        %289 = sbr.rel (%p287) target = $region36
      $region35: #{stacked_convlstm_forward.2} parent=31 // pred_region
        %290 = vst [vmem:[%s280] sm:$0xff] 0.0
        %291 = vst [vmem:[%s285] sm:$0xff] 0.0
      $region36: #{stacked_convlstm_forward.2} parent=31 // pred_fallthru
        _
      %v292 = vld [vmem:[%s266] sm:$0xff]
      %v293 = vld [vmem:[%s280] sm:$0xff]
      %v295 = vcombine.high %v292, %v292
      %v298 = vcombine.low %v293, %v293
      %vm300 = vcmask 1043456
      %v301 = vsel %vm300, %v292, %v298
      %v302 = vsel %vm300, %v295, %v293
      %v303 = vlaneseq
      %v304 = vand.u32 %v303, 127
      %v305 = vadd.s32 %v304, 128
      %vm306 = vcmp.lt.s32.totalorder %v304, 0
      %v307 = vsub.s32 0, %v304
      %v308 = vsel %vm306, %v307, %v304
      %v309 = vshrl.u32 %v308, 4
      %v310 = vand.u32 %v308, 15
      %v311 = vsub.s32 0, %v310
      %v312 = vsel %vm306, %v311, %v310
      %vm313 = vcmp.lt.s32.totalorder %v305, 0
      %v314 = vsub.s32 0, %v305
      %v315 = vsel %vm313, %v314, %v305
      %v316 = vshrl.u32 %v315, 4
      %v317 = vand.u32 %v315, 15
      %v318 = vsub.s32 0, %v317
      %v319 = vsel %vm313, %v318, %v317
      %vm320 = vcmp.ne.s32.totalorder %v312, 0
      %vm321 = vcmp.ne.s32.totalorder %v319, 0
      %vm322 = vcmp.lt.s32.totalorder %v312, 0
      %vm323 = vcmp.lt.s32.totalorder %v319, 0
      %vm324 = vmand %vm322, %vm320
      %vm325 = vmand %vm323, %vm321
      %v326 = vadd.s32 %v312, 16
      %v327 = vadd.s32 %v319, 16
      %v328 = vsel %vm324, %v326, %v312
      %v329 = vsel %vm325, %v327, %v319
      %332 = vrot.lane.b32.xlu0 %v301, 17
      %v333 = vpop.permute.xlu0 %332
      %334 = vrot.lane.b32.xlu0 %v302, 17
      %v335 = vpop.permute.xlu0 %334
      %vm336 = vcmask 138240
      %v337 = vsel %vm336, %v333, %v335
      %v340 = vsel %vm336, 0.0, %v333
      %vm341 = vcmp.ge.s32.totalorder %v328, 1
      %vm342 = vcmp.ge.s32.totalorder %v329, 1
      %v343 = vsel %vm341, %v340, 0.0
      %v344 = vsel %vm342, %v337, 0.0
      %345 = vrot.lane.b32.xlu0 %v301, 16
      %v346 = vpop.permute.xlu0 %345
      %347 = vrot.lane.b32.xlu0 %v302, 16
      %v348 = vpop.permute.xlu0 %347
      %vm349 = vcmask 130048
      %v350 = vsel %vm349, %v346, %v348
      %v353 = vsel %vm349, 0.0, %v346
      %354 = vrot.lane.b32.xlu0 %v301, 15
      %v355 = vpop.permute.xlu0 %354
      %356 = vrot.lane.b32.xlu0 %v302, 15
      %v357 = vpop.permute.xlu0 %356
      %vm358 = vcmask 121856
      %v359 = vsel %vm358, %v355, %v357
      %v362 = vsel %vm358, 0.0, %v355
      %vm363 = vcmp.lt.s32.totalorder %v328, 15
      %vm364 = vcmp.lt.s32.totalorder %v329, 15
      %v365 = vsel %vm363, %v362, 0.0
      %v366 = vsel %vm364, %v359, 0.0
      %367 = vrot.lane.b32.xlu0 %v301, 1
      %v368 = vpop.permute.xlu0 %367
      %369 = vrot.lane.b32.xlu0 %v302, 1
      %v370 = vpop.permute.xlu0 %369
      %vm371 = vcmask 7168
      %v372 = vsel %vm371, %v368, %v370
      %v375 = vsel %vm371, 0.0, %v368
      %v376 = vsel %vm341, %v375, 0.0
      %v377 = vsel %vm342, %v372, 0.0
      %378 = vrot.lane.b32.xlu0 %v301, 127
      %v379 = vpop.permute.xlu0 %378
      %380 = vrot.lane.b32.xlu0 %v302, 127
      %v381 = vpop.permute.xlu0 %380
      %vm382 = vcmask 1039360
      %v383 = vsel %vm382, %v379, %v381
      %v386 = vsel %vm382, %v381, 0.0
      %v387 = vsel %vm363, %v383, 0.0
      %v388 = vsel %vm364, %v386, 0.0
      %389 = vrot.lane.b32.xlu0 %v301, 113
      %v390 = vpop.permute.xlu0 %389
      %391 = vrot.lane.b32.xlu0 %v302, 113
      %v392 = vpop.permute.xlu0 %391
      %vm393 = vcmask 924672
      %v394 = vsel %vm393, %v390, %v392
      %v397 = vsel %vm393, %v392, 0.0
      %v398 = vsel %vm341, %v394, 0.0
      %v399 = vsel %vm342, %v397, 0.0
      %400 = vrot.lane.b32.xlu0 %v301, 112
      %v401 = vpop.permute.xlu0 %400
      %402 = vrot.lane.b32.xlu0 %v302, 112
      %v403 = vpop.permute.xlu0 %402
      %vm404 = vcmask 916480
      %v405 = vsel %vm404, %v401, %v403
      %v408 = vsel %vm404, %v403, 0.0
      %409 = vrot.lane.b32.xlu0 %v301, 111
      %v410 = vpop.permute.xlu0 %409
      %411 = vrot.lane.b32.xlu0 %v302, 111
      %v412 = vpop.permute.xlu0 %411
      %vm413 = vcmask 908288
      %v414 = vsel %vm413, %v410, %v412
      %v417 = vsel %vm413, %v412, 0.0
      %v418 = vsel %vm363, %v414, 0.0
      %v419 = vsel %vm364, %v417, 0.0
      %v420 = vld [vmem:[%s1] sm:$0xff]
      %v421 = vld [vmem:[%s1 + $0x8] sm:$0xff]
      %v422 = vld [vmem:[%s2] sm:$0xff]
      %v423 = vld [vmem:[%s2 + $0x8] sm:$0xff]
      %425 = vset.pattern.permute.xlu0 0
      %426 = vperm.xlu0 %425, %v422
      %v427 = vpop.permute.xlu0 %426
      %430 = vset.pattern.permute.xlu0 0
      %431 = vperm.xlu0 %430, %v423
      %v432 = vpop.permute.xlu0 %431
      %vm434 = vcmask 588800
      %v436 = vsel %vm434, %v420, 0
      %v439 = vsel %vm434, %v421, 0
      %441 = vmatprep.subr.mxu0 0.0
      %442 = vmatpush1.msra.mxu0 0.0
      %443 = vmatprep.subr.mxu0 0.0
      %444 = vmatpush1.msra.mxu0 0.0
      %445 = vmatprep.subr.mxu0 0.0
      %446 = vmatpush1.msra.mxu0 0.0
      %447 = vmatprep.subr.mxu0 0.0
      %448 = vmatpush1.msra.mxu0 0.0
      %449 = vmatprep.subr.mxu0 0.0
      %450 = vmatpush1.msra.mxu0 0.0
      %451 = vmatprep.subr.mxu0 0.0
      %452 = vmatpush1.msra.mxu0 0.0
      %453 = vmatprep.subr.mxu0 0.0
      %454 = vmatpush1.msra.mxu0 0.0
      %455 = vmatprep.subr.mxu0 %v419
      %456 = vmatpush1.msra.mxu0 %v418
      %457 = vmatprep.subr.mxu0 %v408
      %458 = vmatpush1.msra.mxu0 %v405
      %459 = vmatprep.subr.mxu0 %v399
      %460 = vmatpush1.msra.mxu0 %v398
      %461 = vmatprep.subr.mxu0 %v388
      %462 = vmatpush1.msra.mxu0 %v387
      %463 = vmatprep.subr.mxu0 %v302
      %464 = vmatpush1.msra.mxu0 %v301
      %465 = vmatprep.subr.mxu0 %v377
      %466 = vmatpush1.msra.mxu0 %v376
      %467 = vmatprep.subr.mxu0 %v366
      %468 = vmatpush1.msra.mxu0 %v365
      %469 = vmatprep.subr.mxu0 %v350
      %470 = vmatpush1.msra.mxu0 %v353
      %471 = vmatprep.subr.mxu0 %v344
      %472 = vmatpush1.msra.mxu0 %v343
      %473 = vmatprep.subr.mxu0 0.0
      %474 = vmatpush2.msra.mxu0 0.0
      %475 = vmatprep.subr.mxu0 0.0
      %476 = vmatpush2.msra.mxu0 0.0
      %477 = vmatprep.subr.mxu0 0.0
      %478 = vmatpush2.msra.mxu0 0.0
      %479 = vmatprep.subr.mxu0 0.0
      %480 = vmatpush2.msra.mxu0 0.0
      %481 = vmatprep.subr.mxu0 0.0
      %482 = vmatpush2.msra.mxu0 0.0
      %483 = vmatprep.subr.mxu0 0.0
      %484 = vmatpush2.msra.mxu0 0.0
      %485 = vmatprep.subr.mxu0 0.0
      %486 = vmatpush2.msra.mxu0 0.0
      %487 = vmatprep.subr.mxu0 0.0
      %488 = vmatpush2.msra.mxu0 0.0
      %489 = vmatprep.subr.mxu0 0.0
      %490 = vmatpush2.msra.mxu0 0.0
      %491 = vmatprep.subr.mxu0 0.0
      %492 = vmatpush2.msra.mxu0 0.0
      %493 = vmatprep.subr.mxu0 0.0
      %494 = vmatpush2.msra.mxu0 0.0
      %495 = vmatprep.subr.mxu0 0.0
      %496 = vmatpush2.msra.mxu0 0.0
      %497 = vmatprep.subr.mxu0 0.0
      %498 = vmatpush2.msra.mxu0 0.0
      %499 = vmatprep.subr.mxu0 0.0
      %500 = vmatpush2.msra.mxu0 0.0
      %501 = vmatprep.subr.mxu0 0.0
      %502 = vmatpush2.msra.mxu0 0.0
      %503 = vmatprep.subr.mxu0 0.0
      %504 = vmatpush2.msra.mxu0 0.0
      %505 = vmatprep.mubr.f32.mxu0 0.0
      %506 = vmatmul.mubr.f32.gmra.mxu0 %v436
      %v507 = vpop.f32.mrf.mxu0
      %v508 = vadd.f32 %v427, %v507
      %v509 = vpop.f32.mrf.mxu0
      %v510 = vadd.f32 %v427, %v509
      %511 = vmatprep.mubr.f32.mxu0 0.0
      %512 = vmatmul.mubr.f32.gmra.mxu0 %v439
      %v513 = vpop.f32.mrf.mxu0
      %v514 = vadd.f32 %v432, %v513
      %v515 = vpop.f32.mrf.mxu0
      %v516 = vadd.f32 %v432, %v515
      %517 = vdwg.mxu0
      %v518 = vxor.u32 %v508, 2147483648
      %v519 = vxor.u32 %v510, 2147483648
      %v520 = vmul.f32 %v518, 1.442695
      %v521 = vpow.pop %v520
      %v522 = vmul.f32 %v519, 1.442695
      %v523 = vpow.pop %v522
      %v524 = vadd.f32 %v521, 1.0
      %v525 = vadd.f32 %v523, 1.0
      %v526 = vrcp.pop %v524
      %v527 = vmul.f32 1.0, %v526
      %v528 = vrcp.pop %v525
      %v529 = vmul.f32 1.0, %v528
      %v530 = vtanh.pop %v514
      %v531 = vtanh.pop %v516
      %v532 = vxor.u32 %v514, 2147483648
      %v533 = vxor.u32 %v516, 2147483648
      %v534 = vmul.f32 %v532, 1.442695
      %v535 = vpow.pop %v534
      %v536 = vmul.f32 %v533, 1.442695
      %v537 = vpow.pop %v536
      %v538 = vadd.f32 %v535, 1.0
      %v539 = vadd.f32 %v537, 1.0
      %v540 = vrcp.pop %v538
      %v541 = vmul.f32 1.0, %v540
      %v542 = vrcp.pop %v539
      %v543 = vmul.f32 1.0, %v542
      %v544 = vld [vmem:[%s285] sm:$0xff]
      %v546 = vcombine.low %v544, %v544
      %v548 = vmul.f32 %v527, %v546
      %v549 = vmul.f32 %v529, %v544
      %v550 = vmul.f32 %v527, %v530
      %v551 = vmul.f32 %v529, %v531
      %v554 = vrot.slane %v550, 4
      %v555 = vrot.slane %v551, 4
      %v558 = vadd.f32 %v548, %v554
      %v559 = vadd.f32 %v549, %v555
      %v560 = vtanh.pop %v558
      %v561 = vtanh.pop %v559
      %v562 = vmul.f32 %v541, %v560
      %v563 = vmul.f32 %v543, %v561
      %v566 = vcombine.high %v562, %v563
      %568 = vst [vmem:[%s280] sm:$0xff] %v566
      %v571 = vcombine.high %v558, %v559
      %573 = vst [vmem:[%s285] sm:$0xff] %v571
      %574 = vst [vmem:[%s275] sm:$0xff] %v566
      %p575 = scmp.lt.s32.totalorder %s21, 1
      %s576 = scalar_select %p575, %s21, 1
      %p577 = scmp.lt.s32.totalorder %s22, 7
      %s578 = scalar_select %p577, %s22, 7
      %s579 = smul.addr %s578, 2
      %s580 = smul.addr %s576, 16
      %s581 = sadd.s32 %s579, %s580
      %s582 = smul.addr %s581, 4
      %s583 = scalar_lea.vmem %s3, %s582
      %p584 = scmp.lt.s32.totalorder %s21, 1
      %s585 = scalar_select %p584, %s21, 1
      %s586 = smul.addr %s585, 2
      %s587 = smul.addr %s586, 4
      %s588 = scalar_lea.vmem %s4, %s587
      %p589 = scmp.lt.s32.totalorder %s21, 1
      %s590 = scalar_select %p589, %s21, 1
      %s591 = smul.addr %s590, 2
      %s592 = smul.addr %s591, 4
      %s593 = scalar_lea.vmem %s5, %s592
      // Predicated region
      $region37: #{stacked_convlstm_forward.2} parent=31 // pred_check
        %p594 = pneg %p119
      $region38: #{stacked_convlstm_forward.2} parent=31 // pred_check_branch
        %596 = sbr.rel (%p594) target = $region40
      $region39: #{stacked_convlstm_forward.2} parent=31 // pred_region
        _
      $region40: #{stacked_convlstm_forward.2} parent=31 // pred_fallthru
        _
      // Predicated region
      $region41: #{stacked_convlstm_forward.2} parent=31 // pred_check
        %p597 = pneg %p145
      $region42: #{stacked_convlstm_forward.2} parent=31 // pred_check_branch
        %599 = sbr.rel (%p597) target = $region44
      $region43: #{stacked_convlstm_forward.2} parent=31 // pred_region
        _
      $region44: #{stacked_convlstm_forward.2} parent=31 // pred_fallthru
        _
      // Predicated region
      $region45: #{stacked_convlstm_forward.2} parent=31 // pred_check
        %p600 = pneg %p171
      $region46: #{stacked_convlstm_forward.2} parent=31 // pred_check_branch
        %602 = sbr.rel (%p600) target = $region48
      $region47: #{stacked_convlstm_forward.2} parent=31 // pred_region
        _
      $region48: #{stacked_convlstm_forward.2} parent=31 // pred_fallthru
        _
    $region32: #{stacked_convlstm_forward.2} parent=5 // pred_fallthru
      _
    %p603 = scmp.le.s32.totalorder 2, %s12
    // Predicated region
    $region49: #{stacked_convlstm_forward.2} parent=5 // pred_check
      %p604 = pneg %p603
    $region50: #{stacked_convlstm_forward.2} parent=5 // pred_check_branch
      %606 = sbr.rel (%p604) target = $region52
    $region51: #{stacked_convlstm_forward.2} parent=5 // pred_region
      %s607 = ssub.s32 %s12, 2
      // Predicated region
      $region53: #{stacked_convlstm_forward.2} parent=51 // pred_check
        %p608 = pneg %p125
      $region54: #{stacked_convlstm_forward.2} parent=51 // pred_check_branch
        %610 = sbr.rel (%p608) target = $region56
      $region55: #{stacked_convlstm_forward.2} parent=51 // pred_region
        %p611 = scmp.lt.s32.totalorder %s23, 1
        %s612 = scalar_select %p611, %s23, 1
        %p613 = scmp.lt.s32.totalorder %s24, 7
        %s614 = scalar_select %p613, %s24, 7
        %s615 = smul.addr %s614, 2
        %s616 = smul.addr %s612, 16
        %s617 = sadd.s32 %s615, %s616
        %s618 = smul.addr %s617, 4
        %s619 = scalar_lea.vmem %s3, %s618
      $region56: #{stacked_convlstm_forward.2} parent=51 // pred_fallthru
        _
      // Predicated region
      $region57: #{stacked_convlstm_forward.2} parent=51 // pred_check
        %p620 = pneg %p151
      $region58: #{stacked_convlstm_forward.2} parent=51 // pred_check_branch
        %622 = sbr.rel (%p620) target = $region60
      $region59: #{stacked_convlstm_forward.2} parent=51 // pred_region
        %p623 = scmp.lt.s32.totalorder %s23, 1
        %s624 = scalar_select %p623, %s23, 1
        %s625 = smul.addr %s624, 2
        %s626 = smul.addr %s625, 4
        %s627 = scalar_lea.vmem %s4, %s626
      $region60: #{stacked_convlstm_forward.2} parent=51 // pred_fallthru
        _
      // Predicated region
      $region61: #{stacked_convlstm_forward.2} parent=51 // pred_check
        %p628 = pneg %p177
      $region62: #{stacked_convlstm_forward.2} parent=51 // pred_check_branch
        %630 = sbr.rel (%p628) target = $region64
      $region63: #{stacked_convlstm_forward.2} parent=51 // pred_region
        %p631 = scmp.lt.s32.totalorder %s23, 1
        %s632 = scalar_select %p631, %s23, 1
        %s633 = smul.addr %s632, 2
        %s634 = smul.addr %s633, 4
        %s635 = scalar_lea.vmem %s5, %s634
      $region64: #{stacked_convlstm_forward.2} parent=51 // pred_fallthru
        _
    $region52: #{stacked_convlstm_forward.2} parent=5 // pred_fallthru
      _
  $region6: #{stacked_convlstm_forward.2} parent=0 // loop_footer
    %s16 = sadd.s32 1, %s12
  $region7: #{stacked_convlstm_forward.2} parent=0 // loop_footer_branch
    %11 = sbr.rel target = $region3
  $region8: #{stacked_convlstm_forward.2} parent=0 // loop_exit
    _

</llo_original>
